<compile_context>
chip_gen: v6e
topology: v6e:2x2x1
jax: 0.10.0
libtpu: 0.0.40
codegen_flags: <defaults>
</compile_context>

<pallas_src>
import jax
import jax.numpy as jnp
from jax import lax
from jax.experimental import pallas as pl
from jax.experimental.pallas import tpu as pltpu


def _ceil_to(x, k):
    return ((x + k - 1) // k) * k


def _make_loss_kernel(*, tile_rows, n_rays, n_pts, grid,
                      eikonal_weight, fg_mask_loss_weight, loss_rgb_weight):
    ew = float(eikonal_weight)
    mw = float(fg_mask_loss_weight)
    rw = float(loss_rgb_weight)
    inv_rgb = 1.0 / float(n_rays * 3)
    inv_eik = 1.0 / float(n_pts)
    inv_bce = 1.0 / float(n_rays)

    def kernel(rgb_v_ref, rgb_gt_ref, grad_ref, w_ref, bg_ref, out_ref, acc_ref):
        i = pl.program_id(0)

        # ---- init merged accumulator on first grid step ----
        @pl.when(i == 0)
        def _():
            acc_ref[...] = jnp.zeros_like(acc_ref)

        # Global row index of each sublane row in this tile (for masking the ragged
        # last block and the steps where this array's block index is clamped).
        row = i * tile_rows + lax.broadcasted_iota(jnp.int32, (tile_rows, 1), 0)
        ray_mask = row < n_rays          # (tile_rows, 1)
        pt_mask = row < n_pts            # (tile_rows, 1)

        # ---- RGB L1 partial sum (cast in-kernel; inputs stream in native dtype) ----
        dif = jnp.abs(rgb_v_ref[...].astype(jnp.float32)
                      - rgb_gt_ref[...].astype(jnp.float32))           # (tile_rows, 3)
        rgb_part = jnp.sum(dif, axis=-1, keepdims=True)                # XLU lane reduce
        rgb_part = jnp.where(ray_mask, rgb_part, 0.0)

        # ---- Eikonal partial sum: (||g||_2 - 1)^2 per point ----
        g = grad_ref[...].astype(jnp.float32)                          # (tile_rows, d)
        sq = jnp.sum(g * g, axis=-1, keepdims=True)
        eik = (jnp.sqrt(sq) - 1.0) ** 2
        eik = jnp.where(pt_mask, eik, 0.0)

        # ---- Foreground-mask BCE partial sum ----
        w_sum = jnp.sum(w_ref[...].astype(jnp.float32), axis=-1, keepdims=True)
        w_clip = jnp.clip(w_sum, 0.001, 1.0 - 0.001)
        fg = 1.0 - bg_ref[...].astype(jnp.float32)                     # (tile_rows, 1)
        bce = -(fg * jnp.log(w_clip) + (1.0 - fg) * jnp.log(1.0 - w_clip))
        bce = jnp.where(ray_mask, bce, 0.0)

        # ---- merged accumulator: lane 0 = rgb, 1 = eikonal, 2 = bce ----
        lane3 = lax.broadcasted_iota(jnp.int32, (tile_rows, 3), 1)
        part = jnp.where(lane3 == 0, rgb_part,
               jnp.where(lane3 == 1, eik, bce))
        acc_ref[...] += part

        # ---- finalize on the last grid step ----
        @pl.when(i == grid - 1)
        def _():
            rgb_loss = jnp.sum(acc_ref[:, 0:1]) * inv_rgb
            eik_loss = jnp.sum(acc_ref[:, 1:2]) * inv_eik
            bce_loss = jnp.sum(acc_ref[:, 2:3]) * inv_bce
            total = ew * eik_loss + mw * bce_loss + rw * rgb_loss
            lane = lax.broadcasted_iota(jnp.int32, (1, 128), 1)
            out_ref[...] = jnp.where(lane == 0, rgb_loss,
                           jnp.where(lane == 1, eik_loss,
                           jnp.where(lane == 2, bce_loss,
                           jnp.where(lane == 3, total, 0.0))))

    return kernel


def volsdf_loss(rgb_values, rgb_gt, grad_theta, weights, bg_mask, *,
                eikonal_weight=0.1, fg_mask_loss_weight=0.05,
                loss_rgb_weight=1.0, tile_rows=2048):
    """Pallas implementation of VolSDFLoss.forward (all loss terms present)."""
    # Mimic torch reshape/squeeze; for contiguous inputs these are free views.
    rgb_values = rgb_values.reshape(-1, 3)
    rgb_gt = rgb_gt.reshape(-1, 3)
    grad_theta = grad_theta.reshape(grad_theta.shape[0], -1)
    weights = weights.reshape(-1, weights.shape[-1])
    bg = bg_mask.reshape(-1, 1)
    if not jnp.issubdtype(bg.dtype, jnp.floating):
        bg = bg.astype(jnp.float32)        # tiny (N, 1) array; negligible copy

    n = rgb_values.shape[0]                # rays
    m, d = grad_theta.shape                # eikonal points, grad dim
    s = weights.shape[-1]                  # samples per ray
    assert rgb_gt.shape[0] == n and weights.shape[0] == n and bg.shape[0] == n

    # TODO(synk): the PyTorch forward's optional branches (missing rgb_values /
    # grad_theta / weights -> 0.0 terms) are host-side control flow; this kernel
    # covers the all-terms-present path (n > 0 and m > 0).

    # ---- Tile sizing: multiple of 8 rows, within a double-buffered VMEM budget,
    # and no larger than the shortest row count (so no block exceeds its array). ----
    lp = lambda c: _ceil_to(max(int(c), 1), 128)     # lane padding inside VMEM
    bytes_per_row = 4 * (2 * (lp(3) + lp(3) + lp(d) + lp(s) + lp(1)) + lp(3))
    vmem_budget = 20 * 1024 * 1024                   # safe under v7x 32 MiB scoped
    tile_cap = max(8, (vmem_budget // bytes_per_row) // 8 * 8)
    rows_min = min(n, m)
    tile_rows = max(8, (min(int(tile_rows), tile_cap, max(rows_min, 8)) // 8) * 8)

    # Degenerate case only: an array with fewer than 8 rows is padded up to one tile.
    def _pad_rows(x, need):
        r = x.shape[0]
        if r < need:
            x = jnp.pad(x, ((0, need - r), (0, 0)))
        return x

    rgb_values = _pad_rows(rgb_values, tile_rows)
    rgb_gt = _pad_rows(rgb_gt, tile_rows)
    weights = _pad_rows(weights, tile_rows)
    bg = _pad_rows(bg, tile_rows)
    grad_theta = _pad_rows(grad_theta, tile_rows)

    nb_ray = pl.cdiv(rgb_values.shape[0], tile_rows)
    nb_pt = pl.cdiv(grad_theta.shape[0], tile_rows)
    grid = max(nb_ray, nb_pt)

    # Clamp each array's block index to its own last valid block: once exhausted the
    # block index stops changing and Pallas skips the re-DMA (masks zero the reuse).
    def ray_map(i):
        return (jnp.minimum(i, nb_ray - 1), 0)

    def pt_map(i):
        return (jnp.minimum(i, nb_pt - 1), 0)

    kernel = _make_loss_kernel(
        tile_rows=tile_rows, n_rays=n, n_pts=m, grid=grid,
        eikonal_weight=eikonal_weight,
        fg_mask_loss_weight=fg_mask_loss_weight,
        loss_rgb_weight=loss_rgb_weight)

    in_bytes = (rgb_values.size * rgb_values.dtype.itemsize
                + rgb_gt.size * rgb_gt.dtype.itemsize
                + grad_theta.size * grad_theta.dtype.itemsize
                + weights.size * weights.dtype.itemsize
                + bg.size * bg.dtype.itemsize)
    cost = pl.CostEstimate(
        flops=int(n * (s + 20) + m * 10),
        transcendentals=int(m + 2 * n),
        bytes_accessed=int(in_bytes + 4 * 128))

    out = pl.pallas_call(
        kernel,
        out_shape=jax.ShapeDtypeStruct((1, 128), jnp.float32),
        grid_spec=pltpu.PrefetchScalarGridSpec(
            num_scalar_prefetch=0,
            grid=(grid,),
            in_specs=[
                pl.BlockSpec((tile_rows, 3), ray_map),
                pl.BlockSpec((tile_rows, 3), ray_map),
                pl.BlockSpec((tile_rows, d), pt_map),
                pl.BlockSpec((tile_rows, s), ray_map),
                pl.BlockSpec((tile_rows, 1), ray_map),
            ],
            out_specs=pl.BlockSpec((1, 128), lambda i: (0, 0)),
            scratch_shapes=[pltpu.VMEM((tile_rows, 3), jnp.float32)],
        ),
        compiler_params=pltpu.CompilerParams(
            dimension_semantics=("arbitrary",),
            vmem_limit_bytes=32 * 1024 * 1024),
        cost_estimate=cost,
    )(rgb_values, rgb_gt, grad_theta, weights, bg)

    return {
        'rgb_loss': out[0, 0],
        'eikonal_loss': out[0, 1],
        'fg_mask_loss': out[0, 2],
        'loss': out[0, 3],
    }


def _reference(rgb_values, rgb_gt, grad_theta, weights, bg_mask, *,
               eikonal_weight=0.1, fg_mask_loss_weight=0.05,
               loss_rgb_weight=1.0):
    rgb_values = rgb_values.reshape(-1, 3)
    rgb_gt = rgb_gt.reshape(-1, 3)
    rgb_loss = jnp.mean(jnp.abs(rgb_values - rgb_gt))
    eik = jnp.mean((jnp.linalg.norm(grad_theta, axis=1) - 1.0) ** 2)
    w = jnp.clip(weights.sum(-1), 0.001, 1.0 - 0.001)
    fg = 1.0 - jnp.squeeze(bg_mask)
    bce = jnp.mean(-(fg * jnp.log(w) + (1.0 - fg) * jnp.log(1.0 - w)))
    loss = (eikonal_weight * eik + fg_mask_loss_weight * bce
            + loss_rgb_weight * rgb_loss)
    return rgb_loss, eik, bce, loss


if __name__ == "__main__":
    key = jax.random.PRNGKey(0)
    k1, k2, k3, k4, k5 = jax.random.split(key, 5)

    # Small shapes; intentionally NOT multiples of 8/128 and with rays != eikonal
    # points to exercise ragged last blocks, per-array index_map clamping and masks.
    N, S, M = 160, 48, 200  # rays, samples per ray, eikonal points

    rgb_values = jax.random.uniform(k1, (N, 3), dtype=jnp.float32)
    rgb_gt = jax.random.uniform(k2, (N, 3), dtype=jnp.float32)
    grad_theta = jax.random.normal(k3, (M, 3), dtype=jnp.float32)
    weights = jax.random.uniform(k4, (N, S), dtype=jnp.float32) / S
    bg_mask = (jax.random.uniform(k5, (N, 1)) > 0.5).astype(jnp.float32)

    out = volsdf_loss(rgb_values, rgb_gt, grad_theta, weights, bg_mask,
                      eikonal_weight=0.1, fg_mask_loss_weight=0.05,
                      loss_rgb_weight=1.0)
    jax.block_until_ready(out['loss'])

    # correctness check against pure-JAX reference
    ref = _reference(rgb_values, rgb_gt, grad_theta, weights, bg_mask,
                     eikonal_weight=0.1, fg_mask_loss_weight=0.05,
                     loss_rgb_weight=1.0)
    got = (out['rgb_loss'], out['eikonal_loss'], out['fg_mask_loss'], out['loss'])
    for g, r in zip(got, ref):
        assert jnp.allclose(g, r, rtol=1e-5, atol=1e-6), (g, r)

    print("KERNEL_OK")
</pallas_src>

<mosaic_0001>
module attributes {stable_mosaic.version = 11 : i64} {
  func.func @kernel(%arg0: i32, %arg1: memref<160x3xf32, #tpu.memory_space<vmem>>, %arg2: memref<160x3xf32, #tpu.memory_space<vmem>>, %arg3: memref<160x3xf32, #tpu.memory_space<vmem>>, %arg4: memref<160x48xf32, #tpu.memory_space<vmem>>, %arg5: memref<160x1xf32, #tpu.memory_space<vmem>>, %arg6: memref<1x128xf32, #tpu.memory_space<vmem>>, %arg7: memref<160x3xf32, #tpu.memory_space<vmem>>) attributes {dimension_semantics = [#tpu.dimension_semantics<arbitrary>], iteration_bounds = array<i64: 2>, scalar_prefetch = 0 : i64, scratch_operands = 1 : i64, tpu.core_type = #tpu.core_type<tc>, window_params = [{transform_indices = @transform_0, window_bounds = array<i64: 160, 3>}, {transform_indices = @transform_1, window_bounds = array<i64: 160, 3>}, {transform_indices = @transform_2, window_bounds = array<i64: 160, 3>}, {transform_indices = @transform_3, window_bounds = array<i64: 160, 48>}, {transform_indices = @transform_4, window_bounds = array<i64: 160, 1>}, {pipeline_mode = #tpu.pipeline_mode<synchronous>, transform_indices = @transform_5, window_bounds = array<i64: 1, 128>}]} {
    %c0_i32 = arith.constant 0 : i32
    %0 = arith.cmpi eq, %arg0, %c0_i32 : i32
    %1 = arith.extui %0 : i1 to i32
    %c0_i32_0 = arith.constant 0 : i32
    %2 = arith.cmpi ne, %1, %c0_i32_0 : i32
    scf.if %2 {
      %cst_30 = arith.constant 0.000000e+00 : f32
      %71 = vector.broadcast %cst_30 : f32 to vector<160x3xf32>
      %c0_31 = arith.constant 0 : index
      %c0_32 = arith.constant 0 : index
      %72 = vector.load %arg7[%c0_31, %c0_32] : memref<160x3xf32, #tpu.memory_space<vmem>>, vector<160x3xf32>
      tpu.vector_store %arg7[%c0_31, %c0_32], %71 {strides = array<i32>} : memref<160x3xf32, #tpu.memory_space<vmem>>, vector<160x3xf32>,
    } else {
    }
    %c160_i32 = arith.constant 160 : i32
    %3 = arith.muli %arg0, %c160_i32 : i32
    %4 = tpu.iota {dimensions = array<i32: 0>} : vector<160x1xi32>
    %5 = vector.broadcast %3 : i32 to vector<160x1xi32>
    %6 = arith.addi %5, %4 : vector<160x1xi32>
    %c160_i32_1 = arith.constant 160 : i32
    %7 = vector.broadcast %c160_i32_1 : i32 to vector<160x1xi32>
    %8 = arith.cmpi slt, %6, %7 : vector<160x1xi32>
    %c200_i32 = arith.constant 200 : i32
    %9 = vector.broadcast %c200_i32 : i32 to vector<160x1xi32>
    %10 = arith.cmpi slt, %6, %9 : vector<160x1xi32>
    %c0 = arith.constant 0 : index
    %c0_2 = arith.constant 0 : index
    %11 = vector.load %arg1[%c0, %c0_2] : memref<160x3xf32, #tpu.memory_space<vmem>>, vector<160x3xf32>
    %c0_3 = arith.constant 0 : index
    %c0_4 = arith.constant 0 : index
    %12 = vector.load %arg2[%c0_3, %c0_4] : memref<160x3xf32, #tpu.memory_space<vmem>>, vector<160x3xf32>
    %13 = arith.subf %11, %12 : vector<160x3xf32>
    %14 = math.absf %13 : vector<160x3xf32>
    %cst = arith.constant dense<0.000000e+00> : vector<160xf32>
    %15 = vector.multi_reduction <add>, %14, %cst [1] : vector<160x3xf32> to vector<160xf32>
    %16 = vector.shape_cast %15 : vector<160xf32> to vector<160x1xf32>
    %cst_5 = arith.constant 0.000000e+00 : f32
    %17 = vector.broadcast %cst_5 : f32 to vector<160x1xf32>
    %18 = arith.select %8, %16, %17 : vector<160x1xi1>, vector<160x1xf32>
    %c0_6 = arith.constant 0 : index
    %c0_7 = arith.constant 0 : index
    %19 = vector.load %arg3[%c0_6, %c0_7] : memref<160x3xf32, #tpu.memory_space<vmem>>, vector<160x3xf32>
    %20 = arith.mulf %19, %19 : vector<160x3xf32>
    %cst_8 = arith.constant dense<0.000000e+00> : vector<160xf32>
    %21 = vector.multi_reduction <add>, %20, %cst_8 [1] : vector<160x3xf32> to vector<160xf32>
    %22 = vector.shape_cast %21 : vector<160xf32> to vector<160x1xf32>
    %23 = math.sqrt %22 : vector<160x1xf32>
    %cst_9 = arith.constant 1.000000e+00 : f32
    %24 = vector.broadcast %cst_9 : f32 to vector<160x1xf32>
    %25 = arith.subf %23, %24 : vector<160x1xf32>
    %26 = arith.mulf %25, %25 : vector<160x1xf32>
    %cst_10 = arith.constant 0.000000e+00 : f32
    %27 = vector.broadcast %cst_10 : f32 to vector<160x1xf32>
    %28 = arith.select %10, %26, %27 : vector<160x1xi1>, vector<160x1xf32>
    %c0_11 = arith.constant 0 : index
    %c0_12 = arith.constant 0 : index
    %29 = vector.load %arg4[%c0_11, %c0_12] : memref<160x48xf32, #tpu.memory_space<vmem>>, vector<160x48xf32>
    %cst_13 = arith.constant dense<0.000000e+00> : vector<160xf32>
    %30 = vector.multi_reduction <add>, %29, %cst_13 [1] : vector<160x48xf32> to vector<160xf32>
    %31 = vector.shape_cast %30 : vector<160xf32> to vector<160x1xf32>
    %cst_14 = arith.constant 1.000000e-03 : f32
    %cst_15 = arith.constant 9.990000e-01 : f32
    %32 = vector.broadcast %cst_14 : f32 to vector<160x1xf32>
    %33 = arith.maximumf %32, %31 : vector<160x1xf32>
    %34 = vector.broadcast %cst_15 : f32 to vector<160x1xf32>
    %35 = arith.minimumf %34, %33 : vector<160x1xf32>
    %c0_16 = arith.constant 0 : index
    %c0_17 = arith.constant 0 : index
    %36 = vector.load %arg5[%c0_16, %c0_17] : memref<160x1xf32, #tpu.memory_space<vmem>>, vector<160x1xf32>
    %cst_18 = arith.constant 1.000000e+00 : f32
    %37 = vector.broadcast %cst_18 : f32 to vector<160x1xf32>
    %38 = arith.subf %37, %36 : vector<160x1xf32>
    %39 = math.log %35 : vector<160x1xf32>
    %40 = arith.mulf %38, %39 : vector<160x1xf32>
    %cst_19 = arith.constant 1.000000e+00 : f32
    %41 = vector.broadcast %cst_19 : f32 to vector<160x1xf32>
    %42 = arith.subf %41, %38 : vector<160x1xf32>
    %cst_20 = arith.constant 1.000000e+00 : f32
    %43 = vector.broadcast %cst_20 : f32 to vector<160x1xf32>
    %44 = arith.subf %43, %35 : vector<160x1xf32>
    %45 = math.log %44 : vector<160x1xf32>
    %46 = arith.mulf %42, %45 : vector<160x1xf32>
    %47 = arith.addf %40, %46 : vector<160x1xf32>
    %cst_21 = arith.constant 0.000000e+00 : f32
    %48 = vector.broadcast %cst_21 : f32 to vector<160x1xf32>
    %49 = arith.subf %48, %47 : vector<160x1xf32>
    %cst_22 = arith.constant 0.000000e+00 : f32
    %50 = vector.broadcast %cst_22 : f32 to vector<160x1xf32>
    %51 = arith.select %8, %49, %50 : vector<160x1xi1>, vector<160x1xf32>
    %52 = tpu.iota {dimensions = array<i32: 1>} : vector<160x3xi32>
    %c0_i32_23 = arith.constant 0 : i32
    %53 = vector.broadcast %c0_i32_23 : i32 to vector<160x3xi32>
    %54 = arith.cmpi eq, %52, %53 : vector<160x3xi32>
    %c1_i32 = arith.constant 1 : i32
    %55 = vector.broadcast %c1_i32 : i32 to vector<160x3xi32>
    %56 = arith.cmpi eq, %52, %55 : vector<160x3xi32>
    %57 = vector.shape_cast %28 : vector<160x1xf32> to vector<160x1xf32>
    %58 = vector.broadcast %57 : vector<160x1xf32> to vector<160x3xf32>
    %59 = vector.shape_cast %51 : vector<160x1xf32> to vector<160x1xf32>
    %60 = vector.broadcast %59 : vector<160x1xf32> to vector<160x3xf32>
    %61 = arith.select %56, %58, %60 : vector<160x3xi1>, vector<160x3xf32>
    %62 = vector.shape_cast %18 : vector<160x1xf32> to vector<160x1xf32>
    %63 = vector.broadcast %62 : vector<160x1xf32> to vector<160x3xf32>
    %64 = arith.select %54, %63, %61 : vector<160x3xi1>, vector<160x3xf32>
    %c0_24 = arith.constant 0 : index
    %c0_25 = arith.constant 0 : index
    %65 = vector.load %arg7[%c0_24, %c0_25] : memref<160x3xf32, #tpu.memory_space<vmem>>, vector<160x3xf32>
    %66 = arith.addf %65, %64 : vector<160x3xf32>
    %c0_26 = arith.constant 0 : index
    %c0_27 = arith.constant 0 : index
    %67 = vector.load %arg7[%c0_26, %c0_27] : memref<160x3xf32, #tpu.memory_space<vmem>>, vector<160x3xf32>
    tpu.vector_store %arg7[%c0_26, %c0_27], %66 {strides = array<i32>} : memref<160x3xf32, #tpu.memory_space<vmem>>, vector<160x3xf32>,
    %c1_i32_28 = arith.constant 1 : i32
    %68 = arith.cmpi eq, %arg0, %c1_i32_28 : i32
    %69 = arith.extui %68 : i1 to i32
    %c0_i32_29 = arith.constant 0 : i32
    %70 = arith.cmpi ne, %69, %c0_i32_29 : i32
    scf.if %70 {
      %c0_30 = arith.constant 0 : index
      %c0_31 = arith.constant 0 : index
      %71 = vector.load %arg7[%c0_30, %c0_31] : memref<160x3xf32, #tpu.memory_space<vmem>>, vector<160x1xf32>
      %72 = vector.shape_cast %71 : vector<160x1xf32> to vector<1x160x1xf32>
      %cst_32 = arith.constant dense<0.000000e+00> : vector<1xf32>
      %73 = vector.multi_reduction <add>, %72, %cst_32 [1, 2] : vector<1x160x1xf32> to vector<1xf32>
      %74 = vector.shape_cast %73 : vector<1xf32> to vector<1x1x1xf32>
      %75 = vector.extract %74[0, 0, 0] : f32 from vector<1x1x1xf32>
      %cst_33 = arith.constant 0.00208333344 : f32
      %76 = arith.mulf %75, %cst_33 : f32
      %c0_34 = arith.constant 0 : index
      %c1 = arith.constant 1 : index
      %77 = vector.load %arg7[%c0_34, %c1] : memref<160x3xf32, #tpu.memory_space<vmem>>, vector<160x1xf32>
      %78 = vector.shape_cast %77 : vector<160x1xf32> to vector<1x160x1xf32>
      %cst_35 = arith.constant dense<0.000000e+00> : vector<1xf32>
      %79 = vector.multi_reduction <add>, %78, %cst_35 [1, 2] : vector<1x160x1xf32> to vector<1xf32>
      %80 = vector.shape_cast %79 : vector<1xf32> to vector<1x1x1xf32>
      %81 = vector.extract %80[0, 0, 0] : f32 from vector<1x1x1xf32>
      %cst_36 = arith.constant 5.000000e-03 : f32
      %82 = arith.mulf %81, %cst_36 : f32
      %c0_37 = arith.constant 0 : index
      %c2 = arith.constant 2 : index
      %83 = vector.load %arg7[%c0_37, %c2] : memref<160x3xf32, #tpu.memory_space<vmem>>, vector<160x1xf32>
      %84 = vector.shape_cast %83 : vector<160x1xf32> to vector<1x160x1xf32>
      %cst_38 = arith.constant dense<0.000000e+00> : vector<1xf32>
      %85 = vector.multi_reduction <add>, %84, %cst_38 [1, 2] : vector<1x160x1xf32> to vector<1xf32>
      %86 = vector.shape_cast %85 : vector<1xf32> to vector<1x1x1xf32>
      %87 = vector.extract %86[0, 0, 0] : f32 from vector<1x1x1xf32>
      %cst_39 = arith.constant 6.250000e-03 : f32
      %88 = arith.mulf %87, %cst_39 : f32
      %cst_40 = arith.constant 1.000000e-01 : f32
      %89 = arith.mulf %cst_40, %82 : f32
      %cst_41 = arith.constant 5.000000e-02 : f32
      %90 = arith.mulf %cst_41, %88 : f32
      %91 = arith.addf %89, %90 : f32
      %cst_42 = arith.constant 1.000000e+00 : f32
      %92 = arith.mulf %cst_42, %76 : f32
      %93 = arith.addf %91, %92 : f32
      %94 = tpu.iota {dimensions = array<i32: 1>} : vector<1x128xi32>
      %c0_i32_43 = arith.constant 0 : i32
      %95 = vector.broadcast %c0_i32_43 : i32 to vector<1x128xi32>
      %96 = arith.cmpi eq, %94, %95 : vector<1x128xi32>
      %c1_i32_44 = arith.constant 1 : i32
      %97 = vector.broadcast %c1_i32_44 : i32 to vector<1x128xi32>
      %98 = arith.cmpi eq, %94, %97 : vector<1x128xi32>
      %c2_i32 = arith.constant 2 : i32
      %99 = vector.broadcast %c2_i32 : i32 to vector<1x128xi32>
      %100 = arith.cmpi eq, %94, %99 : vector<1x128xi32>
      %c3_i32 = arith.constant 3 : i32
      %101 = vector.broadcast %c3_i32 : i32 to vector<1x128xi32>
      %102 = arith.cmpi eq, %94, %101 : vector<1x128xi32>
      %cst_45 = arith.constant 0.000000e+00 : f32
      %103 = vector.broadcast %93 : f32 to vector<1x128xf32>
      %104 = vector.broadcast %cst_45 : f32 to vector<1x128xf32>
      %105 = arith.select %102, %103, %104 : vector<1x128xi1>, vector<1x128xf32>
      %106 = vector.broadcast %88 : f32 to vector<1x128xf32>
      %107 = arith.select %100, %106, %105 : vector<1x128xi1>, vector<1x128xf32>
      %108 = vector.broadcast %82 : f32 to vector<1x128xf32>
      %109 = arith.select %98, %108, %107 : vector<1x128xi1>, vector<1x128xf32>
      %110 = vector.broadcast %76 : f32 to vector<1x128xf32>
      %111 = arith.select %96, %110, %109 : vector<1x128xi1>, vector<1x128xf32>
      %c0_46 = arith.constant 0 : index
      %c0_47 = arith.constant 0 : index
      %112 = vector.load %arg6[%c0_46, %c0_47] : memref<1x128xf32, #tpu.memory_space<vmem>>, vector<1x128xf32>
      tpu.vector_store %arg6[%c0_46, %c0_47], %111 {strides = array<i32>} : memref<1x128xf32, #tpu.memory_space<vmem>>, vector<1x128xf32>,
    } else {
    }
    return
  }
  func.func @transform_0(%arg0: i32) -> (i32, i32) {
    %c0_i32 = arith.constant 0 : i32
    %0 = arith.minsi %arg0, %c0_i32 : i32
    %c0_i32_0 = arith.constant 0 : i32
    %c0_i32_1 = arith.constant 0 : i32
    return %0, %c0_i32_0 : i32, i32
  }
  func.func @transform_1(%arg0: i32) -> (i32, i32) {
    %c0_i32 = arith.constant 0 : i32
    %0 = arith.minsi %arg0, %c0_i32 : i32
    %c0_i32_0 = arith.constant 0 : i32
    %c0_i32_1 = arith.constant 0 : i32
    return %0, %c0_i32_0 : i32, i32
  }
  func.func @transform_2(%arg0: i32) -> (i32, i32) {
    %c1_i32 = arith.constant 1 : i32
    %0 = arith.minsi %arg0, %c1_i32 : i32
    %c0_i32 = arith.constant 0 : i32
    %c0_i32_0 = arith.constant 0 : i32
    return %0, %c0_i32 : i32, i32
  }
  func.func @transform_3(%arg0: i32) -> (i32, i32) {
    %c0_i32 = arith.constant 0 : i32
    %0 = arith.minsi %arg0, %c0_i32 : i32
    %c0_i32_0 = arith.constant 0 : i32
    %c0_i32_1 = arith.constant 0 : i32
    return %0, %c0_i32_0 : i32, i32
  }
  func.func @transform_4(%arg0: i32) -> (i32, i32) {
    %c0_i32 = arith.constant 0 : i32
    %0 = arith.minsi %arg0, %c0_i32 : i32
    %c0_i32_0 = arith.constant 0 : i32
    %c0_i32_1 = arith.constant 0 : i32
    return %0, %c0_i32_0 : i32, i32
  }
  func.func @transform_5(%arg0: i32) -> (i32, i32) {
    %c0_i32 = arith.constant 0 : i32
    %c0_i32_0 = arith.constant 0 : i32
    %c0_i32_1 = arith.constant 0 : i32
    return %c0_i32, %c0_i32_0 : i32, i32
  }
}

</mosaic_0001>

<llo_original>
// kernel: tpu_custom_call.1
$region0: #{tpu_custom_call.1}
  #allocation0 [shape = 'u32[]', space=smem, size = 0x4, offset = 0x4, fixed_abs, tag = 'smem constant byte address 0x4 - core index']
  #allocation1 [shape = 'u32[144,128]{1,0:T(1,128)}', space=vmem, size = 0x12000, scoped, tag = 'internal scratch']
  #allocation2 [shape = 'f32[160,3]{1,0:T(8,128)}', space=vmem, size = 0x14000, scoped, tag = 'scratch operand']
  %s0 = inlined_call_operand.vmem [shape: f32[160,3], index: 0, kind: input, shape index: {}]
  %s1 = inlined_call_operand.vmem [shape: f32[160,3], index: 1, kind: input, shape index: {}]
  %s2 = inlined_call_operand.vmem [shape: f32[200,3], index: 2, kind: input, shape index: {}]
  %s3 = inlined_call_operand.vmem [shape: f32[160,48], index: 3, kind: input, shape index: {}]
  %s4 = inlined_call_operand.vmem [shape: f32[160,1], index: 4, kind: input, shape index: {}]
  %s5 = inlined_call_operand.hbm [shape: f32[1,128], index: 5, kind: output, shape index: {}]
  %s6 = sld [smem:[#allocation0]]
  $region61: #{tpu_custom_call.1} parent=0
    _
  %s8 = ssub.s32 1, %s6
  %s9 = scalar_select 0, %s8, %s6
  $region1: #{tpu_custom_call.1} parent=0
    #allocation3 [shape = 'u8[512]{0}', space=vmem, size = 0x400, scoped, tag = 'output window, operand 0, single buffered']
    #allocation4 [shape = 's32[2]{0}', space=sflag, size = 0x8, scoped, tag = 'scoped memory for tpu_custom_call.1']
    %10 = vsyncpa [#allocation4], 0
    loop: start=0, step=1, limit=4
    $region2: #{tpu_custom_call.1} parent=1 // loop_pre_header
      _
    $region3: #{tpu_custom_call.1} parent=1 // loop_header
      %s12 = sphi 0, %s16
      %p13 = scmp.ge.s32.totalorder %s12, 4
      %s26 = sphi 0, %s28
      %s29 = sphi 0, %s26
      %s30 = sphi 0, %s29
      %s46 = sphi 0, %s30
      %s56 = sphi 0, %s58
      %s59 = sphi 0, %s56
      %s60 = sphi 0, %s59
      %s76 = sphi 0, %s60
      %s86 = sphi 0, %s88
      %s89 = sphi 0, %s86
      %s90 = sphi 0, %s89
      %s106 = sphi 0, %s90
      %s116 = sphi 0, %s118
      %s119 = sphi 0, %s116
      %s120 = sphi 0, %s119
      %s136 = sphi 0, %s120
      %s146 = sphi 0, %s148
      %s149 = sphi 0, %s146
      %s150 = sphi 0, %s149
      %s166 = sphi 0, %s150
      %s170 = sphi 0, %s170
      %s172 = sphi 0, %s170
      %s173 = sphi 0, %s172
      %s187 = sphi 0, %s173
    $region4: #{tpu_custom_call.1} parent=1 // loop_header_branch
      %15 = sbr.rel (%p13) target = $region8
    $region5: #{tpu_custom_call.1} parent=1 // loop_body
      %s17 = ssub.s32 %s12, 1
      %s18 = ssub.s32 %s12, 2
      %s19 = sadd.s32 %s12, 1
      %p20 = scmp.lt.s32.totalorder %s12, 0
      %s21 = scalar_select %p20, %s12, 0
      %p22 = scmp.lt.s32.totalorder %s19, 0
      %s23 = scalar_select %p22, %s19, 0
      %s24 = ssub.s32 %s21, %s23
      %p25 = scmp.eq.s32.totalorder %s24, 0
      %s27 = sadd.s32 %s26, 1
      %s28 = scalar_select %p25, %s26, %s27
      %p31 = pneg %p25
      %p32 = scmp.eq.s32.totalorder %s12, 1
      %p33 = por %p31, %p32
      %p34 = scmp.ne.s32.totalorder %s26, %s29
      %p35 = scmp.eq.s32.totalorder %s12, 0
      %p36 = por %p34, %p35
      %p37 = scmp.ne.s32.totalorder %s26, %s29
      %p38 = scmp.eq.s32.totalorder %s17, 1
      %p39 = por %p37, %p38
      %p40 = scmp.ne.s32.totalorder %s29, %s30
      %p41 = scmp.eq.s32.totalorder %s17, 0
      %p42 = por %p40, %p41
      %p43 = scmp.ne.s32.totalorder %s29, %s30
      %p44 = scmp.eq.s32.totalorder %s18, 1
      %p45 = por %p43, %p44
      %p47 = scmp.ne.s32.totalorder %s30, %s46
      %p48 = scmp.eq.s32.totalorder %s18, 0
      %p49 = por %p47, %p48
      %p50 = scmp.lt.s32.totalorder %s12, 0
      %s51 = scalar_select %p50, %s12, 0
      %p52 = scmp.lt.s32.totalorder %s19, 0
      %s53 = scalar_select %p52, %s19, 0
      %s54 = ssub.s32 %s51, %s53
      %p55 = scmp.eq.s32.totalorder %s54, 0
      %s57 = sadd.s32 %s56, 1
      %s58 = scalar_select %p55, %s56, %s57
      %p61 = pneg %p55
      %p62 = scmp.eq.s32.totalorder %s12, 1
      %p63 = por %p61, %p62
      %p64 = scmp.ne.s32.totalorder %s56, %s59
      %p65 = scmp.eq.s32.totalorder %s12, 0
      %p66 = por %p64, %p65
      %p67 = scmp.ne.s32.totalorder %s56, %s59
      %p68 = scmp.eq.s32.totalorder %s17, 1
      %p69 = por %p67, %p68
      %p70 = scmp.ne.s32.totalorder %s59, %s60
      %p71 = scmp.eq.s32.totalorder %s17, 0
      %p72 = por %p70, %p71
      %p73 = scmp.ne.s32.totalorder %s59, %s60
      %p74 = scmp.eq.s32.totalorder %s18, 1
      %p75 = por %p73, %p74
      %p77 = scmp.ne.s32.totalorder %s60, %s76
      %p78 = scmp.eq.s32.totalorder %s18, 0
      %p79 = por %p77, %p78
      %p80 = scmp.lt.s32.totalorder %s12, 1
      %s81 = scalar_select %p80, %s12, 1
      %p82 = scmp.lt.s32.totalorder %s19, 1
      %s83 = scalar_select %p82, %s19, 1
      %s84 = ssub.s32 %s81, %s83
      %p85 = scmp.eq.s32.totalorder %s84, 0
      %s87 = sadd.s32 %s86, 1
      %s88 = scalar_select %p85, %s86, %s87
      %p91 = pneg %p85
      %p92 = scmp.eq.s32.totalorder %s12, 1
      %p93 = por %p91, %p92
      %p94 = scmp.ne.s32.totalorder %s86, %s89
      %p95 = scmp.eq.s32.totalorder %s12, 0
      %p96 = por %p94, %p95
      %p97 = scmp.ne.s32.totalorder %s86, %s89
      %p98 = scmp.eq.s32.totalorder %s17, 1
      %p99 = por %p97, %p98
      %p100 = scmp.ne.s32.totalorder %s89, %s90
      %p101 = scmp.eq.s32.totalorder %s17, 0
      %p102 = por %p100, %p101
      %p103 = scmp.ne.s32.totalorder %s89, %s90
      %p104 = scmp.eq.s32.totalorder %s18, 1
      %p105 = por %p103, %p104
      %p107 = scmp.ne.s32.totalorder %s90, %s106
      %p108 = scmp.eq.s32.totalorder %s18, 0
      %p109 = por %p107, %p108
      %p110 = scmp.lt.s32.totalorder %s12, 0
      %s111 = scalar_select %p110, %s12, 0
      %p112 = scmp.lt.s32.totalorder %s19, 0
      %s113 = scalar_select %p112, %s19, 0
      %s114 = ssub.s32 %s111, %s113
      %p115 = scmp.eq.s32.totalorder %s114, 0
      %s117 = sadd.s32 %s116, 1
      %s118 = scalar_select %p115, %s116, %s117
      %p121 = pneg %p115
      %p122 = scmp.eq.s32.totalorder %s12, 1
      %p123 = por %p121, %p122
      %p124 = scmp.ne.s32.totalorder %s116, %s119
      %p125 = scmp.eq.s32.totalorder %s12, 0
      %p126 = por %p124, %p125
      %p127 = scmp.ne.s32.totalorder %s116, %s119
      %p128 = scmp.eq.s32.totalorder %s17, 1
      %p129 = por %p127, %p128
      %p130 = scmp.ne.s32.totalorder %s119, %s120
      %p131 = scmp.eq.s32.totalorder %s17, 0
      %p132 = por %p130, %p131
      %p133 = scmp.ne.s32.totalorder %s119, %s120
      %p134 = scmp.eq.s32.totalorder %s18, 1
      %p135 = por %p133, %p134
      %p137 = scmp.ne.s32.totalorder %s120, %s136
      %p138 = scmp.eq.s32.totalorder %s18, 0
      %p139 = por %p137, %p138
      %p140 = scmp.lt.s32.totalorder %s12, 0
      %s141 = scalar_select %p140, %s12, 0
      %p142 = scmp.lt.s32.totalorder %s19, 0
      %s143 = scalar_select %p142, %s19, 0
      %s144 = ssub.s32 %s141, %s143
      %p145 = scmp.eq.s32.totalorder %s144, 0
      %s147 = sadd.s32 %s146, 1
      %s148 = scalar_select %p145, %s146, %s147
      %p151 = pneg %p145
      %p152 = scmp.eq.s32.totalorder %s12, 1
      %p153 = por %p151, %p152
      %p154 = scmp.ne.s32.totalorder %s146, %s149
      %p155 = scmp.eq.s32.totalorder %s12, 0
      %p156 = por %p154, %p155
      %p157 = scmp.ne.s32.totalorder %s146, %s149
      %p158 = scmp.eq.s32.totalorder %s17, 1
      %p159 = por %p157, %p158
      %p160 = scmp.ne.s32.totalorder %s149, %s150
      %p161 = scmp.eq.s32.totalorder %s17, 0
      %p162 = por %p160, %p161
      %p163 = scmp.ne.s32.totalorder %s149, %s150
      %p164 = scmp.eq.s32.totalorder %s18, 1
      %p165 = por %p163, %p164
      %p167 = scmp.ne.s32.totalorder %s150, %s166
      %p168 = scmp.eq.s32.totalorder %s18, 0
      %p169 = por %p167, %p168
      %s171 = sadd.s32 %s170, 1
      %p174 = scmp.eq.s32.totalorder %s12, 1
      %p175 = scmp.ne.s32.totalorder %s170, %s172
      %p176 = scmp.eq.s32.totalorder %s12, 0
      %p177 = por %p175, %p176
      %p178 = scmp.ne.s32.totalorder %s170, %s172
      %p179 = scmp.eq.s32.totalorder %s17, 1
      %p180 = por %p178, %p179
      %p181 = scmp.ne.s32.totalorder %s172, %s173
      %p182 = scmp.eq.s32.totalorder %s17, 0
      %p183 = por %p181, %p182
      %p184 = scmp.ne.s32.totalorder %s172, %s173
      %p185 = scmp.eq.s32.totalorder %s18, 1
      %p186 = por %p184, %p185
      %p188 = scmp.ne.s32.totalorder %s173, %s187
      %p189 = scmp.eq.s32.totalorder %s18, 0
      %p190 = por %p188, %p189
      %p191 = scmp.le.s32.totalorder 1, %s12
      %p192 = scmp.lt.s32.totalorder %s12, 3
      %p193 = pnand %p191, %p192
      %p194 = pneg %p193
      // Predicated region
      $region9: #{tpu_custom_call.1} parent=5 // pred_check
        _
      $region10: #{tpu_custom_call.1} parent=5 // pred_check_branch
        %196 = sbr.rel (%p193) target = $region12
      $region11: #{tpu_custom_call.1} parent=5 // pred_region
        %s197 = ssub.s32 %s12, 1
      $region12: #{tpu_custom_call.1} parent=5 // pred_fallthru
        _
      %p198 = scmp.lt.s32.totalorder %s12, 2
      // Predicated region
      $region13: #{tpu_custom_call.1} parent=5 // pred_check
        %p199 = pneg %p198
      $region14: #{tpu_custom_call.1} parent=5 // pred_check_branch
        %201 = sbr.rel (%p199) target = $region16
      $region15: #{tpu_custom_call.1} parent=5 // pred_region
        // Predicated region
        $region17: #{tpu_custom_call.1} parent=15 // pred_check
          %p202 = pneg %p36
        $region18: #{tpu_custom_call.1} parent=15 // pred_check_branch
          %204 = sbr.rel (%p202) target = $region20
        $region19: #{tpu_custom_call.1} parent=15 // pred_region
          %p205 = scmp.lt.s32.totalorder %s12, 0
          %s206 = scalar_select %p205, %s12, 0
          %s207 = smul.u32 20, %s206
          %p208 = scmp.lt.s32.totalorder %s207, 19
          %s209 = scalar_select %p208, %s207, 19
          %s210 = smul.addr %s209, 8
          %s211 = scalar_lea.vmem %s0, %s210
          %p212 = scmp.lt.s32.totalorder %s12, 0
          %s213 = scalar_select %p212, %s12, 0
          %s214 = smul.u32 20, %s213
        $region20: #{tpu_custom_call.1} parent=15 // pred_fallthru
          _
        // Predicated region
        $region21: #{tpu_custom_call.1} parent=15 // pred_check
          %p215 = pneg %p66
        $region22: #{tpu_custom_call.1} parent=15 // pred_check_branch
          %217 = sbr.rel (%p215) target = $region24
        $region23: #{tpu_custom_call.1} parent=15 // pred_region
          %p218 = scmp.lt.s32.totalorder %s12, 0
          %s219 = scalar_select %p218, %s12, 0
          %s220 = smul.u32 20, %s219
          %p221 = scmp.lt.s32.totalorder %s220, 19
          %s222 = scalar_select %p221, %s220, 19
          %s223 = smul.addr %s222, 8
          %s224 = scalar_lea.vmem %s1, %s223
          %p225 = scmp.lt.s32.totalorder %s12, 0
          %s226 = scalar_select %p225, %s12, 0
          %s227 = smul.u32 20, %s226
        $region24: #{tpu_custom_call.1} parent=15 // pred_fallthru
          _
        // Predicated region
        $region25: #{tpu_custom_call.1} parent=15 // pred_check
          %p228 = pneg %p96
        $region26: #{tpu_custom_call.1} parent=15 // pred_check_branch
          %230 = sbr.rel (%p228) target = $region28
        $region27: #{tpu_custom_call.1} parent=15 // pred_region
          %p231 = scmp.lt.s32.totalorder %s12, 1
          %s232 = scalar_select %p231, %s12, 1
          %s233 = smul.u32 20, %s232
          %s234 = ssub.s32 25, %s233
          %p235 = scmp.lt.s32.totalorder %s234, 20
          %s236 = scalar_select %p235, %s234, 20
          %s237 = smul.u32 128, %s236
          %p238 = scmp.lt.s32.totalorder %s233, 24
          %s239 = scalar_select %p238, %s233, 24
          %s240 = smul.addr %s239, 8
          %s241 = scalar_lea.vmem %s2, %s240
          %p242 = scmp.lt.s32.totalorder %s12, 1
          %s243 = scalar_select %p242, %s12, 1
          %s244 = smul.u32 20, %s243
          %s245 = ssub.s32 25, %s244
          %p246 = scmp.lt.s32.totalorder %s245, 20
          %s247 = scalar_select %p246, %s245, 20
          %s248 = smul.u32 128, %s247
        $region28: #{tpu_custom_call.1} parent=15 // pred_fallthru
          _
        // Predicated region
        $region29: #{tpu_custom_call.1} parent=15 // pred_check
          %p249 = pneg %p126
        $region30: #{tpu_custom_call.1} parent=15 // pred_check_branch
          %251 = sbr.rel (%p249) target = $region32
        $region31: #{tpu_custom_call.1} parent=15 // pred_region
          %p252 = scmp.lt.s32.totalorder %s12, 0
          %s253 = scalar_select %p252, %s12, 0
          %s254 = smul.u32 20, %s253
          %p255 = scmp.lt.s32.totalorder %s254, 19
          %s256 = scalar_select %p255, %s254, 19
          %s257 = smul.addr %s256, 8
          %s258 = scalar_lea.vmem %s3, %s257
          %p259 = scmp.lt.s32.totalorder %s12, 0
          %s260 = scalar_select %p259, %s12, 0
          %s261 = smul.u32 20, %s260
        $region32: #{tpu_custom_call.1} parent=15 // pred_fallthru
          _
        // Predicated region
        $region33: #{tpu_custom_call.1} parent=15 // pred_check
          %p262 = pneg %p156
        $region34: #{tpu_custom_call.1} parent=15 // pred_check_branch
          %264 = sbr.rel (%p262) target = $region36
        $region35: #{tpu_custom_call.1} parent=15 // pred_region
          %p265 = scmp.lt.s32.totalorder %s12, 0
          %s266 = scalar_select %p265, %s12, 0
          %s267 = smul.u32 20, %s266
          %p268 = scmp.lt.s32.totalorder %s267, 19
          %s269 = scalar_select %p268, %s267, 19
          %s270 = smul.addr %s269, 8
          %s271 = scalar_lea.vmem %s4, %s270
          %p272 = scmp.lt.s32.totalorder %s12, 0
          %s273 = scalar_select %p272, %s12, 0
          %s274 = smul.u32 20, %s273
        $region36: #{tpu_custom_call.1} parent=15 // pred_fallthru
          _
      $region16: #{tpu_custom_call.1} parent=5 // pred_fallthru
        _
      %p275 = scmp.le.s32.totalorder 1, %s12
      %p276 = scmp.lt.s32.totalorder %s12, 3
      %p277 = pnand %p275, %p276
      %p278 = pneg %p277
      // Predicated region
      $region37: #{tpu_custom_call.1} parent=5 // pred_check
        _
      $region38: #{tpu_custom_call.1} parent=5 // pred_check_branch
        %280 = sbr.rel (%p277) target = $region40
      $region39: #{tpu_custom_call.1} parent=5 // pred_region
        %s281 = ssub.s32 %s12, 1
        %p282 = scmp.lt.s32.totalorder %s17, 0
        %s283 = scalar_select %p282, %s17, 0
        %s284 = smul.u32 20, %s283
        %p285 = scmp.lt.s32.totalorder %s284, 19
        %s286 = scalar_select %p285, %s284, 19
        %s287 = smul.addr %s286, 8
        %s288 = scalar_lea.vmem %s0, %s287
        %p289 = pneg %p42
        %p290 = pneg %p39
        %p291 = scmp.lt.s32.totalorder %s17, 0
        %s292 = scalar_select %p291, %s17, 0
        %s293 = smul.u32 20, %s292
        %p294 = scmp.lt.s32.totalorder %s293, 19
        %s295 = scalar_select %p294, %s293, 19
        %s296 = smul.addr %s295, 8
        %s297 = scalar_lea.vmem %s1, %s296
        %p298 = pneg %p72
        %p299 = pneg %p69
        %p300 = scmp.lt.s32.totalorder %s17, 1
        %s301 = scalar_select %p300, %s17, 1
        %s302 = smul.u32 20, %s301
        %s303 = ssub.s32 25, %s302
        %p304 = scmp.lt.s32.totalorder %s303, 20
        %s305 = scalar_select %p304, %s303, 20
        %s306 = smul.u32 128, %s305
        %p307 = scmp.lt.s32.totalorder %s302, 24
        %s308 = scalar_select %p307, %s302, 24
        %s309 = smul.addr %s308, 8
        %s310 = scalar_lea.vmem %s2, %s309
        %p311 = pneg %p102
        %p312 = pneg %p99
        %p313 = scmp.lt.s32.totalorder %s17, 0
        %s314 = scalar_select %p313, %s17, 0
        %s315 = smul.u32 20, %s314
        %p316 = scmp.lt.s32.totalorder %s315, 19
        %s317 = scalar_select %p316, %s315, 19
        %s318 = smul.addr %s317, 8
        %s319 = scalar_lea.vmem %s3, %s318
        %p320 = pneg %p132
        %p321 = pneg %p129
        %p322 = scmp.lt.s32.totalorder %s17, 0
        %s323 = scalar_select %p322, %s17, 0
        %s324 = smul.u32 20, %s323
        %p325 = scmp.lt.s32.totalorder %s324, 19
        %s326 = scalar_select %p325, %s324, 19
        %s327 = smul.addr %s326, 8
        %s328 = scalar_lea.vmem %s4, %s327
        %p329 = pneg %p162
        %p330 = pneg %p159
        %p331 = pneg %p183
        %p332 = pneg %p180
        %p333 = scmp.lt.s32.totalorder %s17, 0
        %s334 = scalar_select %p333, %s17, 0
        %s335 = smul.u32 20, %s334
        %p336 = scmp.lt.s32.totalorder %s335, 19
        %s337 = scalar_select %p336, %s335, 19
        %s338 = smul.addr %s337, 8
        %s339 = scalar_lea.vmem %s0, %s338
        %p340 = scmp.lt.s32.totalorder %s17, 0
        %s341 = scalar_select %p340, %s17, 0
        %s342 = smul.u32 20, %s341
        %p343 = scmp.lt.s32.totalorder %s17, 0
        %s344 = scalar_select %p343, %s17, 0
        %s345 = smul.u32 20, %s344
        %p346 = scmp.lt.s32.totalorder %s345, 19
        %s347 = scalar_select %p346, %s345, 19
        %s348 = smul.addr %s347, 8
        %s349 = scalar_lea.vmem %s1, %s348
        %p350 = scmp.lt.s32.totalorder %s17, 0
        %s351 = scalar_select %p350, %s17, 0
        %s352 = smul.u32 20, %s351
        %p353 = scmp.lt.s32.totalorder %s17, 1
        %s354 = scalar_select %p353, %s17, 1
        %s355 = smul.u32 20, %s354
        %s356 = ssub.s32 25, %s355
        %p357 = scmp.lt.s32.totalorder %s356, 20
        %s358 = scalar_select %p357, %s356, 20
        %s359 = smul.u32 128, %s358
        %p360 = scmp.lt.s32.totalorder %s355, 24
        %s361 = scalar_select %p360, %s355, 24
        %s362 = smul.addr %s361, 8
        %s363 = scalar_lea.vmem %s2, %s362
        %p364 = scmp.lt.s32.totalorder %s17, 1
        %s365 = scalar_select %p364, %s17, 1
        %s366 = smul.u32 20, %s365
        %s367 = ssub.s32 25, %s366
        %p368 = scmp.lt.s32.totalorder %s367, 20
        %s369 = scalar_select %p368, %s367, 20
        %s370 = smul.u32 128, %s369
        %p371 = scmp.lt.s32.totalorder %s17, 0
        %s372 = scalar_select %p371, %s17, 0
        %s373 = smul.u32 20, %s372
        %p374 = scmp.lt.s32.totalorder %s373, 19
        %s375 = scalar_select %p374, %s373, 19
        %s376 = smul.addr %s375, 8
        %s377 = scalar_lea.vmem %s3, %s376
        %p378 = scmp.lt.s32.totalorder %s17, 0
        %s379 = scalar_select %p378, %s17, 0
        %s380 = smul.u32 20, %s379
        %p381 = scmp.lt.s32.totalorder %s17, 0
        %s382 = scalar_select %p381, %s17, 0
        %s383 = smul.u32 20, %s382
        %p384 = scmp.lt.s32.totalorder %s383, 19
        %s385 = scalar_select %p384, %s383, 19
        %s386 = smul.addr %s385, 8
        %s387 = scalar_lea.vmem %s4, %s386
        %p388 = scmp.lt.s32.totalorder %s17, 0
        %s389 = scalar_select %p388, %s17, 0
        %s390 = smul.u32 20, %s389
        %p391 = scmp.eq.s32.totalorder %s17, 0
        // Predicated region
        $region41: #{tpu_custom_call.1} parent=39 // pred_check
          %p392 = pneg %p391
        $region42: #{tpu_custom_call.1} parent=39 // pred_check_branch
          %394 = sbr.rel (%p392) target = $region44
        $region43: #{tpu_custom_call.1} parent=39 // pred_region
          %vm395 = vcmask 23552
          %396 = vst.msk [vmem:[#allocation2] sm:$0xff] %vm395, 0.0
          %397 = vst.msk [vmem:[#allocation2 + $0x8] sm:$0xff] %vm395, 0.0
          %398 = vst.msk [vmem:[#allocation2 + $0x10] sm:$0xff] %vm395, 0.0
          %399 = vst.msk [vmem:[#allocation2 + $0x18] sm:$0xff] %vm395, 0.0
          %400 = vst.msk [vmem:[#allocation2 + $0x20] sm:$0xff] %vm395, 0.0
          %401 = vst.msk [vmem:[#allocation2 + $0x28] sm:$0xff] %vm395, 0.0
          %402 = vst.msk [vmem:[#allocation2 + $0x30] sm:$0xff] %vm395, 0.0
          %403 = vst.msk [vmem:[#allocation2 + $0x38] sm:$0xff] %vm395, 0.0
          %404 = vst.msk [vmem:[#allocation2 + $0x40] sm:$0xff] %vm395, 0.0
          %405 = vst.msk [vmem:[#allocation2 + $0x48] sm:$0xff] %vm395, 0.0
          %406 = vst.msk [vmem:[#allocation2 + $0x50] sm:$0xff] %vm395, 0.0
          %407 = vst.msk [vmem:[#allocation2 + $0x58] sm:$0xff] %vm395, 0.0
          %408 = vst.msk [vmem:[#allocation2 + $0x60] sm:$0xff] %vm395, 0.0
          %409 = vst.msk [vmem:[#allocation2 + $0x68] sm:$0xff] %vm395, 0.0
          %410 = vst.msk [vmem:[#allocation2 + $0x70] sm:$0xff] %vm395, 0.0
          %411 = vst.msk [vmem:[#allocation2 + $0x78] sm:$0xff] %vm395, 0.0
          %412 = vst.msk [vmem:[#allocation2 + $0x80] sm:$0xff] %vm395, 0.0
          %413 = vst.msk [vmem:[#allocation2 + $0x88] sm:$0xff] %vm395, 0.0
          %414 = vst.msk [vmem:[#allocation2 + $0x90] sm:$0xff] %vm395, 0.0
          %415 = vst.msk [vmem:[#allocation2 + $0x98] sm:$0xff] %vm395, 0.0
        $region44: #{tpu_custom_call.1} parent=39 // pred_fallthru
          _
        %s416 = smul.u32 %s17, 160
        %v417 = vlaneseq
        %v418 = vshrl.u32 %v417, 7
        %v419 = vadd.s32 %v418, 8
        %v420 = vadd.s32 %v418, 16
        %v421 = vadd.s32 %v418, 24
        %v422 = vadd.s32 %v418, 32
        %v423 = vadd.s32 %v418, 40
        %v424 = vadd.s32 %v418, 48
        %v425 = vadd.s32 %v418, 56
        %v426 = vadd.s32 %v418, 64
        %v427 = vadd.s32 %v418, 72
        %v428 = vadd.s32 %v418, 80
        %v429 = vadd.s32 %v418, 88
        %v430 = vadd.s32 %v418, 96
        %v431 = vadd.s32 %v418, 104
        %v432 = vadd.s32 %v418, 112
        %v433 = vadd.s32 %v418, 120
        %v434 = vadd.s32 %v418, 128
        %v435 = vadd.s32 %v418, 136
        %v436 = vadd.s32 %v418, 144
        %v437 = vadd.s32 %v418, 152
        %v438 = vstv %s416
        %v439 = vadd.s32 %v438, %v418
        %v440 = vadd.s32 %v438, %v419
        %v441 = vadd.s32 %v438, %v420
        %v442 = vadd.s32 %v438, %v421
        %v443 = vadd.s32 %v438, %v422
        %v444 = vadd.s32 %v438, %v423
        %v445 = vadd.s32 %v438, %v424
        %v446 = vadd.s32 %v438, %v425
        %v447 = vadd.s32 %v438, %v426
        %v448 = vadd.s32 %v438, %v427
        %v449 = vadd.s32 %v438, %v428
        %v450 = vadd.s32 %v438, %v429
        %v451 = vadd.s32 %v438, %v430
        %v452 = vadd.s32 %v438, %v431
        %v453 = vadd.s32 %v438, %v432
        %v454 = vadd.s32 %v438, %v433
        %v455 = vadd.s32 %v438, %v434
        %v456 = vadd.s32 %v438, %v435
        %v457 = vadd.s32 %v438, %v436
        %v458 = vadd.s32 %v438, %v437
        %vm459 = vcmp.lt.s32.totalorder %v439, 160
        %vm460 = vcmp.lt.s32.totalorder %v440, 160
        %vm461 = vcmp.lt.s32.totalorder %v441, 160
        %vm462 = vcmp.lt.s32.totalorder %v442, 160
        %vm463 = vcmp.lt.s32.totalorder %v443, 160
        %vm464 = vcmp.lt.s32.totalorder %v444, 160
        %vm465 = vcmp.lt.s32.totalorder %v445, 160
        %vm466 = vcmp.lt.s32.totalorder %v446, 160
        %vm467 = vcmp.lt.s32.totalorder %v447, 160
        %vm468 = vcmp.lt.s32.totalorder %v448, 160
        %vm469 = vcmp.lt.s32.totalorder %v449, 160
        %vm470 = vcmp.lt.s32.totalorder %v450, 160
        %vm471 = vcmp.lt.s32.totalorder %v451, 160
        %vm472 = vcmp.lt.s32.totalorder %v452, 160
        %vm473 = vcmp.lt.s32.totalorder %v453, 160
        %vm474 = vcmp.lt.s32.totalorder %v454, 160
        %vm475 = vcmp.lt.s32.totalorder %v455, 160
        %vm476 = vcmp.lt.s32.totalorder %v456, 160
        %vm477 = vcmp.lt.s32.totalorder %v457, 160
        %vm478 = vcmp.lt.s32.totalorder %v458, 160
        %vm479 = vcmp.lt.s32.totalorder %v439, 200
        %vm480 = vcmp.lt.s32.totalorder %v440, 200
        %vm481 = vcmp.lt.s32.totalorder %v441, 200
        %vm482 = vcmp.lt.s32.totalorder %v442, 200
        %vm483 = vcmp.lt.s32.totalorder %v443, 200
        %vm484 = vcmp.lt.s32.totalorder %v444, 200
        %vm485 = vcmp.lt.s32.totalorder %v445, 200
        %vm486 = vcmp.lt.s32.totalorder %v446, 200
        %vm487 = vcmp.lt.s32.totalorder %v447, 200
        %vm488 = vcmp.lt.s32.totalorder %v448, 200
        %vm489 = vcmp.lt.s32.totalorder %v449, 200
        %vm490 = vcmp.lt.s32.totalorder %v450, 200
        %vm491 = vcmp.lt.s32.totalorder %v451, 200
        %vm492 = vcmp.lt.s32.totalorder %v452, 200
        %vm493 = vcmp.lt.s32.totalorder %v453, 200
        %vm494 = vcmp.lt.s32.totalorder %v454, 200
        %vm495 = vcmp.lt.s32.totalorder %v455, 200
        %vm496 = vcmp.lt.s32.totalorder %v456, 200
        %vm497 = vcmp.lt.s32.totalorder %v457, 200
        %vm498 = vcmp.lt.s32.totalorder %v458, 200
        %v499 = vld [vmem:[%s339] sm:$0xff]
        %v500 = vld [vmem:[%s339 + $0x8] sm:$0xff]
        %v501 = vld [vmem:[%s339 + $0x10] sm:$0xff]
        %v502 = vld [vmem:[%s339 + $0x18] sm:$0xff]
        %v503 = vld [vmem:[%s339 + $0x20] sm:$0xff]
        %v504 = vld [vmem:[%s339 + $0x28] sm:$0xff]
        %v505 = vld [vmem:[%s339 + $0x30] sm:$0xff]
        %v506 = vld [vmem:[%s339 + $0x38] sm:$0xff]
        %v507 = vld [vmem:[%s339 + $0x40] sm:$0xff]
        %v508 = vld [vmem:[%s339 + $0x48] sm:$0xff]
        %v509 = vld [vmem:[%s339 + $0x50] sm:$0xff]
        %v510 = vld [vmem:[%s339 + $0x58] sm:$0xff]
        %v511 = vld [vmem:[%s339 + $0x60] sm:$0xff]
        %v512 = vld [vmem:[%s339 + $0x68] sm:$0xff]
        %v513 = vld [vmem:[%s339 + $0x70] sm:$0xff]
        %v514 = vld [vmem:[%s339 + $0x78] sm:$0xff]
        %v515 = vld [vmem:[%s339 + $0x80] sm:$0xff]
        %v516 = vld [vmem:[%s339 + $0x88] sm:$0xff]
        %v517 = vld [vmem:[%s339 + $0x90] sm:$0xff]
        %v518 = vld [vmem:[%s339 + $0x98] sm:$0xff]
        %v519 = vld [vmem:[%s349] sm:$0xff]
        %v520 = vld [vmem:[%s349 + $0x8] sm:$0xff]
        %v521 = vld [vmem:[%s349 + $0x10] sm:$0xff]
        %v522 = vld [vmem:[%s349 + $0x18] sm:$0xff]
        %v523 = vld [vmem:[%s349 + $0x20] sm:$0xff]
        %v524 = vld [vmem:[%s349 + $0x28] sm:$0xff]
        %v525 = vld [vmem:[%s349 + $0x30] sm:$0xff]
        %v526 = vld [vmem:[%s349 + $0x38] sm:$0xff]
        %v527 = vld [vmem:[%s349 + $0x40] sm:$0xff]
        %v528 = vld [vmem:[%s349 + $0x48] sm:$0xff]
        %v529 = vld [vmem:[%s349 + $0x50] sm:$0xff]
        %v530 = vld [vmem:[%s349 + $0x58] sm:$0xff]
        %v531 = vld [vmem:[%s349 + $0x60] sm:$0xff]
        %v532 = vld [vmem:[%s349 + $0x68] sm:$0xff]
        %v533 = vld [vmem:[%s349 + $0x70] sm:$0xff]
        %v534 = vld [vmem:[%s349 + $0x78] sm:$0xff]
        %v535 = vld [vmem:[%s349 + $0x80] sm:$0xff]
        %v536 = vld [vmem:[%s349 + $0x88] sm:$0xff]
        %v537 = vld [vmem:[%s349 + $0x90] sm:$0xff]
        %v538 = vld [vmem:[%s349 + $0x98] sm:$0xff]
        %v539 = vsub.f32 %v499, %v519
        %v540 = vsub.f32 %v500, %v520
        %v541 = vsub.f32 %v501, %v521
        %v542 = vsub.f32 %v502, %v522
        %v543 = vsub.f32 %v503, %v523
        %v544 = vsub.f32 %v504, %v524
        %v545 = vsub.f32 %v505, %v525
        %v546 = vsub.f32 %v506, %v526
        %v547 = vsub.f32 %v507, %v527
        %v548 = vsub.f32 %v508, %v528
        %v549 = vsub.f32 %v509, %v529
        %v550 = vsub.f32 %v510, %v530
        %v551 = vsub.f32 %v511, %v531
        %v552 = vsub.f32 %v512, %v532
        %v553 = vsub.f32 %v513, %v533
        %v554 = vsub.f32 %v514, %v534
        %v555 = vsub.f32 %v515, %v535
        %v556 = vsub.f32 %v516, %v536
        %v557 = vsub.f32 %v517, %v537
        %v558 = vsub.f32 %v518, %v538
        %v559 = vand.u32 2147483647, %v539
        %v560 = vand.u32 2147483647, %v540
        %v561 = vand.u32 2147483647, %v541
        %v562 = vand.u32 2147483647, %v542
        %v563 = vand.u32 2147483647, %v543
        %v564 = vand.u32 2147483647, %v544
        %v565 = vand.u32 2147483647, %v545
        %v566 = vand.u32 2147483647, %v546
        %v567 = vand.u32 2147483647, %v547
        %v568 = vand.u32 2147483647, %v548
        %v569 = vand.u32 2147483647, %v549
        %v570 = vand.u32 2147483647, %v550
        %v571 = vand.u32 2147483647, %v551
        %v572 = vand.u32 2147483647, %v552
        %v573 = vand.u32 2147483647, %v553
        %v574 = vand.u32 2147483647, %v554
        %v575 = vand.u32 2147483647, %v555
        %v576 = vand.u32 2147483647, %v556
        %v577 = vand.u32 2147483647, %v557
        %v578 = vand.u32 2147483647, %v558
        %vm579 = vcmask 23552
        %v580 = vsel %vm579, %v559, 0.0
        %581 = vadd.xlane.f32.xlu0 %v580
        %v582 = vpop.xlane.xlu0 %581
        %v583 = vsel %vm579, %v560, 0.0
        %584 = vadd.xlane.f32.xlu0 %v583
        %v585 = vpop.xlane.xlu0 %584
        %v586 = vsel %vm579, %v561, 0.0
        %587 = vadd.xlane.f32.xlu0 %v586
        %v588 = vpop.xlane.xlu0 %587
        %v589 = vsel %vm579, %v562, 0.0
        %590 = vadd.xlane.f32.xlu0 %v589
        %v591 = vpop.xlane.xlu0 %590
        %v592 = vsel %vm579, %v563, 0.0
        %593 = vadd.xlane.f32.xlu0 %v592
        %v594 = vpop.xlane.xlu0 %593
        %v595 = vsel %vm579, %v564, 0.0
        %596 = vadd.xlane.f32.xlu0 %v595
        %v597 = vpop.xlane.xlu0 %596
        %v598 = vsel %vm579, %v565, 0.0
        %599 = vadd.xlane.f32.xlu0 %v598
        %v600 = vpop.xlane.xlu0 %599
        %v601 = vsel %vm579, %v566, 0.0
        %602 = vadd.xlane.f32.xlu0 %v601
        %v603 = vpop.xlane.xlu0 %602
        %v604 = vsel %vm579, %v567, 0.0
        %605 = vadd.xlane.f32.xlu0 %v604
        %v606 = vpop.xlane.xlu0 %605
        %v607 = vsel %vm579, %v568, 0.0
        %608 = vadd.xlane.f32.xlu0 %v607
        %v609 = vpop.xlane.xlu0 %608
        %v610 = vsel %vm579, %v569, 0.0
        %611 = vadd.xlane.f32.xlu0 %v610
        %v612 = vpop.xlane.xlu0 %611
        %v613 = vsel %vm579, %v570, 0.0
        %614 = vadd.xlane.f32.xlu0 %v613
        %v615 = vpop.xlane.xlu0 %614
        %v616 = vsel %vm579, %v571, 0.0
        %617 = vadd.xlane.f32.xlu0 %v616
        %v618 = vpop.xlane.xlu0 %617
        %v619 = vsel %vm579, %v572, 0.0
        %620 = vadd.xlane.f32.xlu0 %v619
        %v621 = vpop.xlane.xlu0 %620
        %v622 = vsel %vm579, %v573, 0.0
        %623 = vadd.xlane.f32.xlu0 %v622
        %v624 = vpop.xlane.xlu0 %623
        %v625 = vsel %vm579, %v574, 0.0
        %626 = vadd.xlane.f32.xlu0 %v625
        %v627 = vpop.xlane.xlu0 %626
        %v628 = vsel %vm579, %v575, 0.0
        %629 = vadd.xlane.f32.xlu0 %v628
        %v630 = vpop.xlane.xlu0 %629
        %v631 = vsel %vm579, %v576, 0.0
        %632 = vadd.xlane.f32.xlu0 %v631
        %v633 = vpop.xlane.xlu0 %632
        %v634 = vsel %vm579, %v577, 0.0
        %635 = vadd.xlane.f32.xlu0 %v634
        %v636 = vpop.xlane.xlu0 %635
        %v637 = vsel %vm579, %v578, 0.0
        %638 = vadd.xlane.f32.xlu0 %v637
        %v639 = vpop.xlane.xlu0 %638
        %v640 = vsel %vm459, %v582, 0.0
        %v641 = vsel %vm460, %v585, 0.0
        %v642 = vsel %vm461, %v588, 0.0
        %v643 = vsel %vm462, %v591, 0.0
        %v644 = vsel %vm463, %v594, 0.0
        %v645 = vsel %vm464, %v597, 0.0
        %v646 = vsel %vm465, %v600, 0.0
        %v647 = vsel %vm466, %v603, 0.0
        %v648 = vsel %vm467, %v606, 0.0
        %v649 = vsel %vm468, %v609, 0.0
        %v650 = vsel %vm469, %v612, 0.0
        %v651 = vsel %vm470, %v615, 0.0
        %v652 = vsel %vm471, %v618, 0.0
        %v653 = vsel %vm472, %v621, 0.0
        %v654 = vsel %vm473, %v624, 0.0
        %v655 = vsel %vm474, %v627, 0.0
        %v656 = vsel %vm475, %v630, 0.0
        %v657 = vsel %vm476, %v633, 0.0
        %v658 = vsel %vm477, %v636, 0.0
        %v659 = vsel %vm478, %v639, 0.0
        %v660 = vld [vmem:[%s363] sm:$0xff]
        %v661 = vld [vmem:[%s363 + $0x8] sm:$0xff]
        %v662 = vld [vmem:[%s363 + $0x10] sm:$0xff]
        %v663 = vld [vmem:[%s363 + $0x18] sm:$0xff]
        %v664 = vld [vmem:[%s363 + $0x20] sm:$0xff]
        %v665 = vld [vmem:[%s363 + $0x28] sm:$0xff]
        %v666 = vld [vmem:[%s363 + $0x30] sm:$0xff]
        %v667 = vld [vmem:[%s363 + $0x38] sm:$0xff]
        %v668 = vld [vmem:[%s363 + $0x40] sm:$0xff]
        %v669 = vld [vmem:[%s363 + $0x48] sm:$0xff]
        %v670 = vld [vmem:[%s363 + $0x50] sm:$0xff]
        %v671 = vld [vmem:[%s363 + $0x58] sm:$0xff]
        %v672 = vld [vmem:[%s363 + $0x60] sm:$0xff]
        %v673 = vld [vmem:[%s363 + $0x68] sm:$0xff]
        %v674 = vld [vmem:[%s363 + $0x70] sm:$0xff]
        %v675 = vld [vmem:[%s363 + $0x78] sm:$0xff]
        %v676 = vld [vmem:[%s363 + $0x80] sm:$0xff]
        %v677 = vld [vmem:[%s363 + $0x88] sm:$0xff]
        %v678 = vld [vmem:[%s363 + $0x90] sm:$0xff]
        %v679 = vld [vmem:[%s363 + $0x98] sm:$0xff]
        %v680 = vmul.f32 %v660, %v660
        %v681 = vmul.f32 %v661, %v661
        %v682 = vmul.f32 %v662, %v662
        %v683 = vmul.f32 %v663, %v663
        %v684 = vmul.f32 %v664, %v664
        %v685 = vmul.f32 %v665, %v665
        %v686 = vmul.f32 %v666, %v666
        %v687 = vmul.f32 %v667, %v667
        %v688 = vmul.f32 %v668, %v668
        %v689 = vmul.f32 %v669, %v669
        %v690 = vmul.f32 %v670, %v670
        %v691 = vmul.f32 %v671, %v671
        %v692 = vmul.f32 %v672, %v672
        %v693 = vmul.f32 %v673, %v673
        %v694 = vmul.f32 %v674, %v674
        %v695 = vmul.f32 %v675, %v675
        %v696 = vmul.f32 %v676, %v676
        %v697 = vmul.f32 %v677, %v677
        %v698 = vmul.f32 %v678, %v678
        %v699 = vmul.f32 %v679, %v679
        %v700 = vsel %vm579, %v680, 0.0
        %701 = vadd.xlane.f32.xlu0 %v700
        %v702 = vpop.xlane.xlu0 %701
        %v703 = vsel %vm579, %v681, 0.0
        %704 = vadd.xlane.f32.xlu0 %v703
        %v705 = vpop.xlane.xlu0 %704
        %v706 = vsel %vm579, %v682, 0.0
        %707 = vadd.xlane.f32.xlu0 %v706
        %v708 = vpop.xlane.xlu0 %707
        %v709 = vsel %vm579, %v683, 0.0
        %710 = vadd.xlane.f32.xlu0 %v709
        %v711 = vpop.xlane.xlu0 %710
        %v712 = vsel %vm579, %v684, 0.0
        %713 = vadd.xlane.f32.xlu0 %v712
        %v714 = vpop.xlane.xlu0 %713
        %v715 = vsel %vm579, %v685, 0.0
        %716 = vadd.xlane.f32.xlu0 %v715
        %v717 = vpop.xlane.xlu0 %716
        %v718 = vsel %vm579, %v686, 0.0
        %719 = vadd.xlane.f32.xlu0 %v718
        %v720 = vpop.xlane.xlu0 %719
        %v721 = vsel %vm579, %v687, 0.0
        %722 = vadd.xlane.f32.xlu0 %v721
        %v723 = vpop.xlane.xlu0 %722
        %v724 = vsel %vm579, %v688, 0.0
        %725 = vadd.xlane.f32.xlu0 %v724
        %v726 = vpop.xlane.xlu0 %725
        %v727 = vsel %vm579, %v689, 0.0
        %728 = vadd.xlane.f32.xlu0 %v727
        %v729 = vpop.xlane.xlu0 %728
        %v730 = vsel %vm579, %v690, 0.0
        %731 = vadd.xlane.f32.xlu0 %v730
        %v732 = vpop.xlane.xlu0 %731
        %v733 = vsel %vm579, %v691, 0.0
        %734 = vadd.xlane.f32.xlu0 %v733
        %v735 = vpop.xlane.xlu0 %734
        %v736 = vsel %vm579, %v692, 0.0
        %737 = vadd.xlane.f32.xlu0 %v736
        %v738 = vpop.xlane.xlu0 %737
        %v739 = vsel %vm579, %v693, 0.0
        %740 = vadd.xlane.f32.xlu0 %v739
        %v741 = vpop.xlane.xlu0 %740
        %v742 = vsel %vm579, %v694, 0.0
        %743 = vadd.xlane.f32.xlu0 %v742
        %v744 = vpop.xlane.xlu0 %743
        %v745 = vsel %vm579, %v695, 0.0
        %746 = vadd.xlane.f32.xlu0 %v745
        %v747 = vpop.xlane.xlu0 %746
        %v748 = vsel %vm579, %v696, 0.0
        %749 = vadd.xlane.f32.xlu0 %v748
        %v750 = vpop.xlane.xlu0 %749
        %v751 = vsel %vm579, %v697, 0.0
        %752 = vadd.xlane.f32.xlu0 %v751
        %v753 = vpop.xlane.xlu0 %752
        %v754 = vsel %vm579, %v698, 0.0
        %755 = vadd.xlane.f32.xlu0 %v754
        %v756 = vpop.xlane.xlu0 %755
        %v757 = vsel %vm579, %v699, 0.0
        %758 = vadd.xlane.f32.xlu0 %v757
        %v759 = vpop.xlane.xlu0 %758
        %v760 = vrsqrt.pop %v702
        %v761 = vmul.f32 %v702, %v760
        %vm762 = vcmp.eq.f32.partialorder %v702, inf
        %v763 = vsel %vm762, %v702, %v761
        %vm764 = vcmp.eq.f32.partialorder %v702, 0.0
        %v765 = vand.u32 %v702, 2147483648
        %v766 = vsel %vm764, %v765, %v763
        %v767 = vrsqrt.pop %v705
        %v768 = vmul.f32 %v705, %v767
        %vm769 = vcmp.eq.f32.partialorder %v705, inf
        %v770 = vsel %vm769, %v705, %v768
        %vm771 = vcmp.eq.f32.partialorder %v705, 0.0
        %v772 = vand.u32 %v705, 2147483648
        %v773 = vsel %vm771, %v772, %v770
        %v774 = vrsqrt.pop %v708
        %v775 = vmul.f32 %v708, %v774
        %vm776 = vcmp.eq.f32.partialorder %v708, inf
        %v777 = vsel %vm776, %v708, %v775
        %vm778 = vcmp.eq.f32.partialorder %v708, 0.0
        %v779 = vand.u32 %v708, 2147483648
        %v780 = vsel %vm778, %v779, %v777
        %v781 = vrsqrt.pop %v711
        %v782 = vmul.f32 %v711, %v781
        %vm783 = vcmp.eq.f32.partialorder %v711, inf
        %v784 = vsel %vm783, %v711, %v782
        %vm785 = vcmp.eq.f32.partialorder %v711, 0.0
        %v786 = vand.u32 %v711, 2147483648
        %v787 = vsel %vm785, %v786, %v784
        %v788 = vrsqrt.pop %v714
        %v789 = vmul.f32 %v714, %v788
        %vm790 = vcmp.eq.f32.partialorder %v714, inf
        %v791 = vsel %vm790, %v714, %v789
        %vm792 = vcmp.eq.f32.partialorder %v714, 0.0
        %v793 = vand.u32 %v714, 2147483648
        %v794 = vsel %vm792, %v793, %v791
        %v795 = vrsqrt.pop %v717
        %v796 = vmul.f32 %v717, %v795
        %vm797 = vcmp.eq.f32.partialorder %v717, inf
        %v798 = vsel %vm797, %v717, %v796
        %vm799 = vcmp.eq.f32.partialorder %v717, 0.0
        %v800 = vand.u32 %v717, 2147483648
        %v801 = vsel %vm799, %v800, %v798
        %v802 = vrsqrt.pop %v720
        %v803 = vmul.f32 %v720, %v802
        %vm804 = vcmp.eq.f32.partialorder %v720, inf
        %v805 = vsel %vm804, %v720, %v803
        %vm806 = vcmp.eq.f32.partialorder %v720, 0.0
        %v807 = vand.u32 %v720, 2147483648
        %v808 = vsel %vm806, %v807, %v805
        %v809 = vrsqrt.pop %v723
        %v810 = vmul.f32 %v723, %v809
        %vm811 = vcmp.eq.f32.partialorder %v723, inf
        %v812 = vsel %vm811, %v723, %v810
        %vm813 = vcmp.eq.f32.partialorder %v723, 0.0
        %v814 = vand.u32 %v723, 2147483648
        %v815 = vsel %vm813, %v814, %v812
        %v816 = vrsqrt.pop %v726
        %v817 = vmul.f32 %v726, %v816
        %vm818 = vcmp.eq.f32.partialorder %v726, inf
        %v819 = vsel %vm818, %v726, %v817
        %vm820 = vcmp.eq.f32.partialorder %v726, 0.0
        %v821 = vand.u32 %v726, 2147483648
        %v822 = vsel %vm820, %v821, %v819
        %v823 = vrsqrt.pop %v729
        %v824 = vmul.f32 %v729, %v823
        %vm825 = vcmp.eq.f32.partialorder %v729, inf
        %v826 = vsel %vm825, %v729, %v824
        %vm827 = vcmp.eq.f32.partialorder %v729, 0.0
        %v828 = vand.u32 %v729, 2147483648
        %v829 = vsel %vm827, %v828, %v826
        %v830 = vrsqrt.pop %v732
        %v831 = vmul.f32 %v732, %v830
        %vm832 = vcmp.eq.f32.partialorder %v732, inf
        %v833 = vsel %vm832, %v732, %v831
        %vm834 = vcmp.eq.f32.partialorder %v732, 0.0
        %v835 = vand.u32 %v732, 2147483648
        %v836 = vsel %vm834, %v835, %v833
        %v837 = vrsqrt.pop %v735
        %v838 = vmul.f32 %v735, %v837
        %vm839 = vcmp.eq.f32.partialorder %v735, inf
        %v840 = vsel %vm839, %v735, %v838
        %vm841 = vcmp.eq.f32.partialorder %v735, 0.0
        %v842 = vand.u32 %v735, 2147483648
        %v843 = vsel %vm841, %v842, %v840
        %v844 = vrsqrt.pop %v738
        %v845 = vmul.f32 %v738, %v844
        %vm846 = vcmp.eq.f32.partialorder %v738, inf
        %v847 = vsel %vm846, %v738, %v845
        %vm848 = vcmp.eq.f32.partialorder %v738, 0.0
        %v849 = vand.u32 %v738, 2147483648
        %v850 = vsel %vm848, %v849, %v847
        %v851 = vrsqrt.pop %v741
        %v852 = vmul.f32 %v741, %v851
        %vm853 = vcmp.eq.f32.partialorder %v741, inf
        %v854 = vsel %vm853, %v741, %v852
        %vm855 = vcmp.eq.f32.partialorder %v741, 0.0
        %v856 = vand.u32 %v741, 2147483648
        %v857 = vsel %vm855, %v856, %v854
        %v858 = vrsqrt.pop %v744
        %v859 = vmul.f32 %v744, %v858
        %vm860 = vcmp.eq.f32.partialorder %v744, inf
        %v861 = vsel %vm860, %v744, %v859
        %vm862 = vcmp.eq.f32.partialorder %v744, 0.0
        %v863 = vand.u32 %v744, 2147483648
        %v864 = vsel %vm862, %v863, %v861
        %v865 = vrsqrt.pop %v747
        %v866 = vmul.f32 %v747, %v865
        %vm867 = vcmp.eq.f32.partialorder %v747, inf
        %v868 = vsel %vm867, %v747, %v866
        %vm869 = vcmp.eq.f32.partialorder %v747, 0.0
        %v870 = vand.u32 %v747, 2147483648
        %v871 = vsel %vm869, %v870, %v868
        %v872 = vrsqrt.pop %v750
        %v873 = vmul.f32 %v750, %v872
        %vm874 = vcmp.eq.f32.partialorder %v750, inf
        %v875 = vsel %vm874, %v750, %v873
        %vm876 = vcmp.eq.f32.partialorder %v750, 0.0
        %v877 = vand.u32 %v750, 2147483648
        %v878 = vsel %vm876, %v877, %v875
        %v879 = vrsqrt.pop %v753
        %v880 = vmul.f32 %v753, %v879
        %vm881 = vcmp.eq.f32.partialorder %v753, inf
        %v882 = vsel %vm881, %v753, %v880
        %vm883 = vcmp.eq.f32.partialorder %v753, 0.0
        %v884 = vand.u32 %v753, 2147483648
        %v885 = vsel %vm883, %v884, %v882
        %v886 = vrsqrt.pop %v756
        %v887 = vmul.f32 %v756, %v886
        %vm888 = vcmp.eq.f32.partialorder %v756, inf
        %v889 = vsel %vm888, %v756, %v887
        %vm890 = vcmp.eq.f32.partialorder %v756, 0.0
        %v891 = vand.u32 %v756, 2147483648
        %v892 = vsel %vm890, %v891, %v889
        %v893 = vrsqrt.pop %v759
        %v894 = vmul.f32 %v759, %v893
        %vm895 = vcmp.eq.f32.partialorder %v759, inf
        %v896 = vsel %vm895, %v759, %v894
        %vm897 = vcmp.eq.f32.partialorder %v759, 0.0
        %v898 = vand.u32 %v759, 2147483648
        %v899 = vsel %vm897, %v898, %v896
        %v900 = vsub.f32 %v766, 1.0
        %v901 = vsub.f32 %v773, 1.0
        %v902 = vsub.f32 %v780, 1.0
        %v903 = vsub.f32 %v787, 1.0
        %v904 = vsub.f32 %v794, 1.0
        %v905 = vsub.f32 %v801, 1.0
        %v906 = vsub.f32 %v808, 1.0
        %v907 = vsub.f32 %v815, 1.0
        %v908 = vsub.f32 %v822, 1.0
        %v909 = vsub.f32 %v829, 1.0
        %v910 = vsub.f32 %v836, 1.0
        %v911 = vsub.f32 %v843, 1.0
        %v912 = vsub.f32 %v850, 1.0
        %v913 = vsub.f32 %v857, 1.0
        %v914 = vsub.f32 %v864, 1.0
        %v915 = vsub.f32 %v871, 1.0
        %v916 = vsub.f32 %v878, 1.0
        %v917 = vsub.f32 %v885, 1.0
        %v918 = vsub.f32 %v892, 1.0
        %v919 = vsub.f32 %v899, 1.0
        %v920 = vmul.f32 %v900, %v900
        %v921 = vmul.f32 %v901, %v901
        %v922 = vmul.f32 %v902, %v902
        %v923 = vmul.f32 %v903, %v903
        %v924 = vmul.f32 %v904, %v904
        %v925 = vmul.f32 %v905, %v905
        %v926 = vmul.f32 %v906, %v906
        %v927 = vmul.f32 %v907, %v907
        %v928 = vmul.f32 %v908, %v908
        %v929 = vmul.f32 %v909, %v909
        %v930 = vmul.f32 %v910, %v910
        %v931 = vmul.f32 %v911, %v911
        %v932 = vmul.f32 %v912, %v912
        %v933 = vmul.f32 %v913, %v913
        %v934 = vmul.f32 %v914, %v914
        %v935 = vmul.f32 %v915, %v915
        %v936 = vmul.f32 %v916, %v916
        %v937 = vmul.f32 %v917, %v917
        %v938 = vmul.f32 %v918, %v918
        %v939 = vmul.f32 %v919, %v919
        %v940 = vsel %vm479, %v920, 0.0
        %v941 = vsel %vm480, %v921, 0.0
        %v942 = vsel %vm481, %v922, 0.0
        %v943 = vsel %vm482, %v923, 0.0
        %v944 = vsel %vm483, %v924, 0.0
        %v945 = vsel %vm484, %v925, 0.0
        %v946 = vsel %vm485, %v926, 0.0
        %v947 = vsel %vm486, %v927, 0.0
        %v948 = vsel %vm487, %v928, 0.0
        %v949 = vsel %vm488, %v929, 0.0
        %v950 = vsel %vm489, %v930, 0.0
        %v951 = vsel %vm490, %v931, 0.0
        %v952 = vsel %vm491, %v932, 0.0
        %v953 = vsel %vm492, %v933, 0.0
        %v954 = vsel %vm493, %v934, 0.0
        %v955 = vsel %vm494, %v935, 0.0
        %v956 = vsel %vm495, %v936, 0.0
        %v957 = vsel %vm496, %v937, 0.0
        %v958 = vsel %vm497, %v938, 0.0
        %v959 = vsel %vm498, %v939, 0.0
        %v960 = vld [vmem:[%s377] sm:$0xff]
        %v961 = vld [vmem:[%s377 + $0x8] sm:$0xff]
        %v962 = vld [vmem:[%s377 + $0x10] sm:$0xff]
        %v963 = vld [vmem:[%s377 + $0x18] sm:$0xff]
        %v964 = vld [vmem:[%s377 + $0x20] sm:$0xff]
        %v965 = vld [vmem:[%s377 + $0x28] sm:$0xff]
        %v966 = vld [vmem:[%s377 + $0x30] sm:$0xff]
        %v967 = vld [vmem:[%s377 + $0x38] sm:$0xff]
        %v968 = vld [vmem:[%s377 + $0x40] sm:$0xff]
        %v969 = vld [vmem:[%s377 + $0x48] sm:$0xff]
        %v970 = vld [vmem:[%s377 + $0x50] sm:$0xff]
        %v971 = vld [vmem:[%s377 + $0x58] sm:$0xff]
        %v972 = vld [vmem:[%s377 + $0x60] sm:$0xff]
        %v973 = vld [vmem:[%s377 + $0x68] sm:$0xff]
        %v974 = vld [vmem:[%s377 + $0x70] sm:$0xff]
        %v975 = vld [vmem:[%s377 + $0x78] sm:$0xff]
        %v976 = vld [vmem:[%s377 + $0x80] sm:$0xff]
        %v977 = vld [vmem:[%s377 + $0x88] sm:$0xff]
        %v978 = vld [vmem:[%s377 + $0x90] sm:$0xff]
        %v979 = vld [vmem:[%s377 + $0x98] sm:$0xff]
        %vm980 = vcmask 392192
        %v981 = vsel %vm980, %v960, 0.0
        %982 = vadd.xlane.f32.xlu0 %v981
        %v983 = vpop.xlane.xlu0 %982
        %v984 = vsel %vm980, %v961, 0.0
        %985 = vadd.xlane.f32.xlu0 %v984
        %v986 = vpop.xlane.xlu0 %985
        %v987 = vsel %vm980, %v962, 0.0
        %988 = vadd.xlane.f32.xlu0 %v987
        %v989 = vpop.xlane.xlu0 %988
        %v990 = vsel %vm980, %v963, 0.0
        %991 = vadd.xlane.f32.xlu0 %v990
        %v992 = vpop.xlane.xlu0 %991
        %v993 = vsel %vm980, %v964, 0.0
        %994 = vadd.xlane.f32.xlu0 %v993
        %v995 = vpop.xlane.xlu0 %994
        %v996 = vsel %vm980, %v965, 0.0
        %997 = vadd.xlane.f32.xlu0 %v996
        %v998 = vpop.xlane.xlu0 %997
        %v999 = vsel %vm980, %v966, 0.0
        %1000 = vadd.xlane.f32.xlu0 %v999
        %v1001 = vpop.xlane.xlu0 %1000
        %v1002 = vsel %vm980, %v967, 0.0
        %1003 = vadd.xlane.f32.xlu0 %v1002
        %v1004 = vpop.xlane.xlu0 %1003
        %v1005 = vsel %vm980, %v968, 0.0
        %1006 = vadd.xlane.f32.xlu0 %v1005
        %v1007 = vpop.xlane.xlu0 %1006
        %v1008 = vsel %vm980, %v969, 0.0
        %1009 = vadd.xlane.f32.xlu0 %v1008
        %v1010 = vpop.xlane.xlu0 %1009
        %v1011 = vsel %vm980, %v970, 0.0
        %1012 = vadd.xlane.f32.xlu0 %v1011
        %v1013 = vpop.xlane.xlu0 %1012
        %v1014 = vsel %vm980, %v971, 0.0
        %1015 = vadd.xlane.f32.xlu0 %v1014
        %v1016 = vpop.xlane.xlu0 %1015
        %v1017 = vsel %vm980, %v972, 0.0
        %1018 = vadd.xlane.f32.xlu0 %v1017
        %v1019 = vpop.xlane.xlu0 %1018
        %v1020 = vsel %vm980, %v973, 0.0
        %1021 = vadd.xlane.f32.xlu0 %v1020
        %v1022 = vpop.xlane.xlu0 %1021
        %v1023 = vsel %vm980, %v974, 0.0
        %1024 = vadd.xlane.f32.xlu0 %v1023
        %v1025 = vpop.xlane.xlu0 %1024
        %v1026 = vsel %vm980, %v975, 0.0
        %1027 = vadd.xlane.f32.xlu0 %v1026
        %v1028 = vpop.xlane.xlu0 %1027
        %v1029 = vsel %vm980, %v976, 0.0
        %1030 = vadd.xlane.f32.xlu0 %v1029
        %v1031 = vpop.xlane.xlu0 %1030
        %v1032 = vsel %vm980, %v977, 0.0
        %1033 = vadd.xlane.f32.xlu0 %v1032
        %v1034 = vpop.xlane.xlu0 %1033
        %v1035 = vsel %vm980, %v978, 0.0
        %1036 = vadd.xlane.f32.xlu0 %v1035
        %v1037 = vpop.xlane.xlu0 %1036
        %v1038 = vsel %vm980, %v979, 0.0
        %1039 = vadd.xlane.f32.xlu0 %v1038
        %v1040 = vpop.xlane.xlu0 %1039
        %v1041 = vmax.f32 %v983, 0.001
        %v1042 = vmax.f32 %v986, 0.001
        %v1043 = vmax.f32 %v989, 0.001
        %v1044 = vmax.f32 %v992, 0.001
        %v1045 = vmax.f32 %v995, 0.001
        %v1046 = vmax.f32 %v998, 0.001
        %v1047 = vmax.f32 %v1001, 0.001
        %v1048 = vmax.f32 %v1004, 0.001
        %v1049 = vmax.f32 %v1007, 0.001
        %v1050 = vmax.f32 %v1010, 0.001
        %v1051 = vmax.f32 %v1013, 0.001
        %v1052 = vmax.f32 %v1016, 0.001
        %v1053 = vmax.f32 %v1019, 0.001
        %v1054 = vmax.f32 %v1022, 0.001
        %v1055 = vmax.f32 %v1025, 0.001
        %v1056 = vmax.f32 %v1028, 0.001
        %v1057 = vmax.f32 %v1031, 0.001
        %v1058 = vmax.f32 %v1034, 0.001
        %v1059 = vmax.f32 %v1037, 0.001
        %v1060 = vmax.f32 %v1040, 0.001
        %v1061 = vmin.f32 %v1041, 0.999
        %v1062 = vmin.f32 %v1042, 0.999
        %v1063 = vmin.f32 %v1043, 0.999
        %v1064 = vmin.f32 %v1044, 0.999
        %v1065 = vmin.f32 %v1045, 0.999
        %v1066 = vmin.f32 %v1046, 0.999
        %v1067 = vmin.f32 %v1047, 0.999
        %v1068 = vmin.f32 %v1048, 0.999
        %v1069 = vmin.f32 %v1049, 0.999
        %v1070 = vmin.f32 %v1050, 0.999
        %v1071 = vmin.f32 %v1051, 0.999
        %v1072 = vmin.f32 %v1052, 0.999
        %v1073 = vmin.f32 %v1053, 0.999
        %v1074 = vmin.f32 %v1054, 0.999
        %v1075 = vmin.f32 %v1055, 0.999
        %v1076 = vmin.f32 %v1056, 0.999
        %v1077 = vmin.f32 %v1057, 0.999
        %v1078 = vmin.f32 %v1058, 0.999
        %v1079 = vmin.f32 %v1059, 0.999
        %v1080 = vmin.f32 %v1060, 0.999
        %v1081 = vld [vmem:[%s387] sm:$0xff]
        %v1082 = vld [vmem:[%s387 + $0x8] sm:$0xff]
        %v1083 = vld [vmem:[%s387 + $0x10] sm:$0xff]
        %v1084 = vld [vmem:[%s387 + $0x18] sm:$0xff]
        %v1085 = vld [vmem:[%s387 + $0x20] sm:$0xff]
        %v1086 = vld [vmem:[%s387 + $0x28] sm:$0xff]
        %v1087 = vld [vmem:[%s387 + $0x30] sm:$0xff]
        %v1088 = vld [vmem:[%s387 + $0x38] sm:$0xff]
        %v1089 = vld [vmem:[%s387 + $0x40] sm:$0xff]
        %v1090 = vld [vmem:[%s387 + $0x48] sm:$0xff]
        %v1091 = vld [vmem:[%s387 + $0x50] sm:$0xff]
        %v1092 = vld [vmem:[%s387 + $0x58] sm:$0xff]
        %v1093 = vld [vmem:[%s387 + $0x60] sm:$0xff]
        %v1094 = vld [vmem:[%s387 + $0x68] sm:$0xff]
        %v1095 = vld [vmem:[%s387 + $0x70] sm:$0xff]
        %v1096 = vld [vmem:[%s387 + $0x78] sm:$0xff]
        %v1097 = vld [vmem:[%s387 + $0x80] sm:$0xff]
        %v1098 = vld [vmem:[%s387 + $0x88] sm:$0xff]
        %v1099 = vld [vmem:[%s387 + $0x90] sm:$0xff]
        %v1100 = vld [vmem:[%s387 + $0x98] sm:$0xff]
        %v1101 = vsub.f32 1.0, %v1081
        %v1102 = vsub.f32 1.0, %v1082
        %v1103 = vsub.f32 1.0, %v1083
        %v1104 = vsub.f32 1.0, %v1084
        %v1105 = vsub.f32 1.0, %v1085
        %v1106 = vsub.f32 1.0, %v1086
        %v1107 = vsub.f32 1.0, %v1087
        %v1108 = vsub.f32 1.0, %v1088
        %v1109 = vsub.f32 1.0, %v1089
        %v1110 = vsub.f32 1.0, %v1090
        %v1111 = vsub.f32 1.0, %v1091
        %v1112 = vsub.f32 1.0, %v1092
        %v1113 = vsub.f32 1.0, %v1093
        %v1114 = vsub.f32 1.0, %v1094
        %v1115 = vsub.f32 1.0, %v1095
        %v1116 = vsub.f32 1.0, %v1096
        %v1117 = vsub.f32 1.0, %v1097
        %v1118 = vsub.f32 1.0, %v1098
        %v1119 = vsub.f32 1.0, %v1099
        %v1120 = vsub.f32 1.0, %v1100
        %v1121 = vlog2.pop %v1061
        %v1122 = vmul.f32 %v1121, 0.6931472
        %v1123 = vlog2.pop %v1062
        %v1124 = vmul.f32 %v1123, 0.6931472
        %v1125 = vlog2.pop %v1063
        %v1126 = vmul.f32 %v1125, 0.6931472
        %v1127 = vlog2.pop %v1064
        %v1128 = vmul.f32 %v1127, 0.6931472
        %v1129 = vlog2.pop %v1065
        %v1130 = vmul.f32 %v1129, 0.6931472
        %v1131 = vlog2.pop %v1066
        %v1132 = vmul.f32 %v1131, 0.6931472
        %v1133 = vlog2.pop %v1067
        %v1134 = vmul.f32 %v1133, 0.6931472
        %v1135 = vlog2.pop %v1068
        %v1136 = vmul.f32 %v1135, 0.6931472
        %v1137 = vlog2.pop %v1069
        %v1138 = vmul.f32 %v1137, 0.6931472
        %v1139 = vlog2.pop %v1070
        %v1140 = vmul.f32 %v1139, 0.6931472
        %v1141 = vlog2.pop %v1071
        %v1142 = vmul.f32 %v1141, 0.6931472
        %v1143 = vlog2.pop %v1072
        %v1144 = vmul.f32 %v1143, 0.6931472
        %v1145 = vlog2.pop %v1073
        %v1146 = vmul.f32 %v1145, 0.6931472
        %v1147 = vlog2.pop %v1074
        %v1148 = vmul.f32 %v1147, 0.6931472
        %v1149 = vlog2.pop %v1075
        %v1150 = vmul.f32 %v1149, 0.6931472
        %v1151 = vlog2.pop %v1076
        %v1152 = vmul.f32 %v1151, 0.6931472
        %v1153 = vlog2.pop %v1077
        %v1154 = vmul.f32 %v1153, 0.6931472
        %v1155 = vlog2.pop %v1078
        %v1156 = vmul.f32 %v1155, 0.6931472
        %v1157 = vlog2.pop %v1079
        %v1158 = vmul.f32 %v1157, 0.6931472
        %v1159 = vlog2.pop %v1080
        %v1160 = vmul.f32 %v1159, 0.6931472
        %v1161 = vmul.f32 %v1101, %v1122
        %v1162 = vmul.f32 %v1102, %v1124
        %v1163 = vmul.f32 %v1103, %v1126
        %v1164 = vmul.f32 %v1104, %v1128
        %v1165 = vmul.f32 %v1105, %v1130
        %v1166 = vmul.f32 %v1106, %v1132
        %v1167 = vmul.f32 %v1107, %v1134
        %v1168 = vmul.f32 %v1108, %v1136
        %v1169 = vmul.f32 %v1109, %v1138
        %v1170 = vmul.f32 %v1110, %v1140
        %v1171 = vmul.f32 %v1111, %v1142
        %v1172 = vmul.f32 %v1112, %v1144
        %v1173 = vmul.f32 %v1113, %v1146
        %v1174 = vmul.f32 %v1114, %v1148
        %v1175 = vmul.f32 %v1115, %v1150
        %v1176 = vmul.f32 %v1116, %v1152
        %v1177 = vmul.f32 %v1117, %v1154
        %v1178 = vmul.f32 %v1118, %v1156
        %v1179 = vmul.f32 %v1119, %v1158
        %v1180 = vmul.f32 %v1120, %v1160
        %v1181 = vsub.f32 1.0, %v1101
        %v1182 = vsub.f32 1.0, %v1102
        %v1183 = vsub.f32 1.0, %v1103
        %v1184 = vsub.f32 1.0, %v1104
        %v1185 = vsub.f32 1.0, %v1105
        %v1186 = vsub.f32 1.0, %v1106
        %v1187 = vsub.f32 1.0, %v1107
        %v1188 = vsub.f32 1.0, %v1108
        %v1189 = vsub.f32 1.0, %v1109
        %v1190 = vsub.f32 1.0, %v1110
        %v1191 = vsub.f32 1.0, %v1111
        %v1192 = vsub.f32 1.0, %v1112
        %v1193 = vsub.f32 1.0, %v1113
        %v1194 = vsub.f32 1.0, %v1114
        %v1195 = vsub.f32 1.0, %v1115
        %v1196 = vsub.f32 1.0, %v1116
        %v1197 = vsub.f32 1.0, %v1117
        %v1198 = vsub.f32 1.0, %v1118
        %v1199 = vsub.f32 1.0, %v1119
        %v1200 = vsub.f32 1.0, %v1120
        %v1201 = vsub.f32 1.0, %v1061
        %v1202 = vsub.f32 1.0, %v1062
        %v1203 = vsub.f32 1.0, %v1063
        %v1204 = vsub.f32 1.0, %v1064
        %v1205 = vsub.f32 1.0, %v1065
        %v1206 = vsub.f32 1.0, %v1066
        %v1207 = vsub.f32 1.0, %v1067
        %v1208 = vsub.f32 1.0, %v1068
        %v1209 = vsub.f32 1.0, %v1069
        %v1210 = vsub.f32 1.0, %v1070
        %v1211 = vsub.f32 1.0, %v1071
        %v1212 = vsub.f32 1.0, %v1072
        %v1213 = vsub.f32 1.0, %v1073
        %v1214 = vsub.f32 1.0, %v1074
        %v1215 = vsub.f32 1.0, %v1075
        %v1216 = vsub.f32 1.0, %v1076
        %v1217 = vsub.f32 1.0, %v1077
        %v1218 = vsub.f32 1.0, %v1078
        %v1219 = vsub.f32 1.0, %v1079
        %v1220 = vsub.f32 1.0, %v1080
        %v1221 = vlog2.pop %v1201
        %v1222 = vmul.f32 %v1221, 0.6931472
        %v1223 = vlog2.pop %v1202
        %v1224 = vmul.f32 %v1223, 0.6931472
        %v1225 = vlog2.pop %v1203
        %v1226 = vmul.f32 %v1225, 0.6931472
        %v1227 = vlog2.pop %v1204
        %v1228 = vmul.f32 %v1227, 0.6931472
        %v1229 = vlog2.pop %v1205
        %v1230 = vmul.f32 %v1229, 0.6931472
        %v1231 = vlog2.pop %v1206
        %v1232 = vmul.f32 %v1231, 0.6931472
        %v1233 = vlog2.pop %v1207
        %v1234 = vmul.f32 %v1233, 0.6931472
        %v1235 = vlog2.pop %v1208
        %v1236 = vmul.f32 %v1235, 0.6931472
        %v1237 = vlog2.pop %v1209
        %v1238 = vmul.f32 %v1237, 0.6931472
        %v1239 = vlog2.pop %v1210
        %v1240 = vmul.f32 %v1239, 0.6931472
        %v1241 = vlog2.pop %v1211
        %v1242 = vmul.f32 %v1241, 0.6931472
        %v1243 = vlog2.pop %v1212
        %v1244 = vmul.f32 %v1243, 0.6931472
        %v1245 = vlog2.pop %v1213
        %v1246 = vmul.f32 %v1245, 0.6931472
        %v1247 = vlog2.pop %v1214
        %v1248 = vmul.f32 %v1247, 0.6931472
        %v1249 = vlog2.pop %v1215
        %v1250 = vmul.f32 %v1249, 0.6931472
        %v1251 = vlog2.pop %v1216
        %v1252 = vmul.f32 %v1251, 0.6931472
        %v1253 = vlog2.pop %v1217
        %v1254 = vmul.f32 %v1253, 0.6931472
        %v1255 = vlog2.pop %v1218
        %v1256 = vmul.f32 %v1255, 0.6931472
        %v1257 = vlog2.pop %v1219
        %v1258 = vmul.f32 %v1257, 0.6931472
        %v1259 = vlog2.pop %v1220
        %v1260 = vmul.f32 %v1259, 0.6931472
        %v1261 = vmul.f32 %v1181, %v1222
        %v1262 = vmul.f32 %v1182, %v1224
        %v1263 = vmul.f32 %v1183, %v1226
        %v1264 = vmul.f32 %v1184, %v1228
        %v1265 = vmul.f32 %v1185, %v1230
        %v1266 = vmul.f32 %v1186, %v1232
        %v1267 = vmul.f32 %v1187, %v1234
        %v1268 = vmul.f32 %v1188, %v1236
        %v1269 = vmul.f32 %v1189, %v1238
        %v1270 = vmul.f32 %v1190, %v1240
        %v1271 = vmul.f32 %v1191, %v1242
        %v1272 = vmul.f32 %v1192, %v1244
        %v1273 = vmul.f32 %v1193, %v1246
        %v1274 = vmul.f32 %v1194, %v1248
        %v1275 = vmul.f32 %v1195, %v1250
        %v1276 = vmul.f32 %v1196, %v1252
        %v1277 = vmul.f32 %v1197, %v1254
        %v1278 = vmul.f32 %v1198, %v1256
        %v1279 = vmul.f32 %v1199, %v1258
        %v1280 = vmul.f32 %v1200, %v1260
        %v1281 = vadd.f32 %v1161, %v1261
        %v1282 = vadd.f32 %v1162, %v1262
        %v1283 = vadd.f32 %v1163, %v1263
        %v1284 = vadd.f32 %v1164, %v1264
        %v1285 = vadd.f32 %v1165, %v1265
        %v1286 = vadd.f32 %v1166, %v1266
        %v1287 = vadd.f32 %v1167, %v1267
        %v1288 = vadd.f32 %v1168, %v1268
        %v1289 = vadd.f32 %v1169, %v1269
        %v1290 = vadd.f32 %v1170, %v1270
        %v1291 = vadd.f32 %v1171, %v1271
        %v1292 = vadd.f32 %v1172, %v1272
        %v1293 = vadd.f32 %v1173, %v1273
        %v1294 = vadd.f32 %v1174, %v1274
        %v1295 = vadd.f32 %v1175, %v1275
        %v1296 = vadd.f32 %v1176, %v1276
        %v1297 = vadd.f32 %v1177, %v1277
        %v1298 = vadd.f32 %v1178, %v1278
        %v1299 = vadd.f32 %v1179, %v1279
        %v1300 = vadd.f32 %v1180, %v1280
        %v1301 = vsub.f32 0.0, %v1281
        %v1302 = vsub.f32 0.0, %v1282
        %v1303 = vsub.f32 0.0, %v1283
        %v1304 = vsub.f32 0.0, %v1284
        %v1305 = vsub.f32 0.0, %v1285
        %v1306 = vsub.f32 0.0, %v1286
        %v1307 = vsub.f32 0.0, %v1287
        %v1308 = vsub.f32 0.0, %v1288
        %v1309 = vsub.f32 0.0, %v1289
        %v1310 = vsub.f32 0.0, %v1290
        %v1311 = vsub.f32 0.0, %v1291
        %v1312 = vsub.f32 0.0, %v1292
        %v1313 = vsub.f32 0.0, %v1293
        %v1314 = vsub.f32 0.0, %v1294
        %v1315 = vsub.f32 0.0, %v1295
        %v1316 = vsub.f32 0.0, %v1296
        %v1317 = vsub.f32 0.0, %v1297
        %v1318 = vsub.f32 0.0, %v1298
        %v1319 = vsub.f32 0.0, %v1299
        %v1320 = vsub.f32 0.0, %v1300
        %v1321 = vsel %vm459, %v1301, 0.0
        %v1322 = vsel %vm460, %v1302, 0.0
        %v1323 = vsel %vm461, %v1303, 0.0
        %v1324 = vsel %vm462, %v1304, 0.0
        %v1325 = vsel %vm463, %v1305, 0.0
        %v1326 = vsel %vm464, %v1306, 0.0
        %v1327 = vsel %vm465, %v1307, 0.0
        %v1328 = vsel %vm466, %v1308, 0.0
        %v1329 = vsel %vm467, %v1309, 0.0
        %v1330 = vsel %vm468, %v1310, 0.0
        %v1331 = vsel %vm469, %v1311, 0.0
        %v1332 = vsel %vm470, %v1312, 0.0
        %v1333 = vsel %vm471, %v1313, 0.0
        %v1334 = vsel %vm472, %v1314, 0.0
        %v1335 = vsel %vm473, %v1315, 0.0
        %v1336 = vsel %vm474, %v1316, 0.0
        %v1337 = vsel %vm475, %v1317, 0.0
        %v1338 = vsel %vm476, %v1318, 0.0
        %v1339 = vsel %vm477, %v1319, 0.0
        %v1340 = vsel %vm478, %v1320, 0.0
        %v1341 = vlaneseq
        %v1342 = vand.u32 %v1341, 127
        %vm1343 = vcmp.eq.s32.totalorder %v1342, 0
        %vm1344 = vcmp.eq.s32.totalorder %v1342, 1
        %1346 = vset.pattern.permute.xlu0 0
        %1347 = vperm.xlu0 %1346, %v1321
        %v1348 = vpop.permute.xlu0 %1347
        %1351 = vset.pattern.permute.xlu0 0
        %1352 = vperm.xlu0 %1351, %v1322
        %v1353 = vpop.permute.xlu0 %1352
        %1356 = vset.pattern.permute.xlu0 0
        %1357 = vperm.xlu0 %1356, %v1323
        %v1358 = vpop.permute.xlu0 %1357
        %1361 = vset.pattern.permute.xlu0 0
        %1362 = vperm.xlu0 %1361, %v1324
        %v1363 = vpop.permute.xlu0 %1362
        %1366 = vset.pattern.permute.xlu0 0
        %1367 = vperm.xlu0 %1366, %v1325
        %v1368 = vpop.permute.xlu0 %1367
        %1371 = vset.pattern.permute.xlu0 0
        %1372 = vperm.xlu0 %1371, %v1326
        %v1373 = vpop.permute.xlu0 %1372
        %1376 = vset.pattern.permute.xlu0 0
        %1377 = vperm.xlu0 %1376, %v1327
        %v1378 = vpop.permute.xlu0 %1377
        %1381 = vset.pattern.permute.xlu0 0
        %1382 = vperm.xlu0 %1381, %v1328
        %v1383 = vpop.permute.xlu0 %1382
        %1386 = vset.pattern.permute.xlu0 0
        %1387 = vperm.xlu0 %1386, %v1329
        %v1388 = vpop.permute.xlu0 %1387
        %1391 = vset.pattern.permute.xlu0 0
        %1392 = vperm.xlu0 %1391, %v1330
        %v1393 = vpop.permute.xlu0 %1392
        %1396 = vset.pattern.permute.xlu0 0
        %1397 = vperm.xlu0 %1396, %v1331
        %v1398 = vpop.permute.xlu0 %1397
        %1401 = vset.pattern.permute.xlu0 0
        %1402 = vperm.xlu0 %1401, %v1332
        %v1403 = vpop.permute.xlu0 %1402
        %1406 = vset.pattern.permute.xlu0 0
        %1407 = vperm.xlu0 %1406, %v1333
        %v1408 = vpop.permute.xlu0 %1407
        %1411 = vset.pattern.permute.xlu0 0
        %1412 = vperm.xlu0 %1411, %v1334
        %v1413 = vpop.permute.xlu0 %1412
        %1416 = vset.pattern.permute.xlu0 0
        %1417 = vperm.xlu0 %1416, %v1335
        %v1418 = vpop.permute.xlu0 %1417
        %1421 = vset.pattern.permute.xlu0 0
        %1422 = vperm.xlu0 %1421, %v1336
        %v1423 = vpop.permute.xlu0 %1422
        %1426 = vset.pattern.permute.xlu0 0
        %1427 = vperm.xlu0 %1426, %v1337
        %v1428 = vpop.permute.xlu0 %1427
        %1431 = vset.pattern.permute.xlu0 0
        %1432 = vperm.xlu0 %1431, %v1338
        %v1433 = vpop.permute.xlu0 %1432
        %1436 = vset.pattern.permute.xlu0 0
        %1437 = vperm.xlu0 %1436, %v1339
        %v1438 = vpop.permute.xlu0 %1437
        %1441 = vset.pattern.permute.xlu0 0
        %1442 = vperm.xlu0 %1441, %v1340
        %v1443 = vpop.permute.xlu0 %1442
        %v1445 = vsel %vm1344, %v940, %v1348
        %v1446 = vsel %vm1344, %v941, %v1353
        %v1447 = vsel %vm1344, %v942, %v1358
        %v1448 = vsel %vm1344, %v943, %v1363
        %v1449 = vsel %vm1344, %v944, %v1368
        %v1450 = vsel %vm1344, %v945, %v1373
        %v1451 = vsel %vm1344, %v946, %v1378
        %v1452 = vsel %vm1344, %v947, %v1383
        %v1453 = vsel %vm1344, %v948, %v1388
        %v1454 = vsel %vm1344, %v949, %v1393
        %v1455 = vsel %vm1344, %v950, %v1398
        %v1456 = vsel %vm1344, %v951, %v1403
        %v1457 = vsel %vm1344, %v952, %v1408
        %v1458 = vsel %vm1344, %v953, %v1413
        %v1459 = vsel %vm1344, %v954, %v1418
        %v1460 = vsel %vm1344, %v955, %v1423
        %v1461 = vsel %vm1344, %v956, %v1428
        %v1462 = vsel %vm1344, %v957, %v1433
        %v1463 = vsel %vm1344, %v958, %v1438
        %v1464 = vsel %vm1344, %v959, %v1443
        %v1465 = vsel %vm1343, %v640, %v1445
        %v1466 = vsel %vm1343, %v641, %v1446
        %v1467 = vsel %vm1343, %v642, %v1447
        %v1468 = vsel %vm1343, %v643, %v1448
        %v1469 = vsel %vm1343, %v644, %v1449
        %v1470 = vsel %vm1343, %v645, %v1450
        %v1471 = vsel %vm1343, %v646, %v1451
        %v1472 = vsel %vm1343, %v647, %v1452
        %v1473 = vsel %vm1343, %v648, %v1453
        %v1474 = vsel %vm1343, %v649, %v1454
        %v1475 = vsel %vm1343, %v650, %v1455
        %v1476 = vsel %vm1343, %v651, %v1456
        %v1477 = vsel %vm1343, %v652, %v1457
        %v1478 = vsel %vm1343, %v653, %v1458
        %v1479 = vsel %vm1343, %v654, %v1459
        %v1480 = vsel %vm1343, %v655, %v1460
        %v1481 = vsel %vm1343, %v656, %v1461
        %v1482 = vsel %vm1343, %v657, %v1462
        %v1483 = vsel %vm1343, %v658, %v1463
        %v1484 = vsel %vm1343, %v659, %v1464
        %v1485 = vld [vmem:[#allocation2] sm:$0xff]
        %v1486 = vld [vmem:[#allocation2 + $0x8] sm:$0xff]
        %v1487 = vld [vmem:[#allocation2 + $0x10] sm:$0xff]
        %v1488 = vld [vmem:[#allocation2 + $0x18] sm:$0xff]
        %v1489 = vld [vmem:[#allocation2 + $0x20] sm:$0xff]
        %v1490 = vld [vmem:[#allocation2 + $0x28] sm:$0xff]
        %v1491 = vld [vmem:[#allocation2 + $0x30] sm:$0xff]
        %v1492 = vld [vmem:[#allocation2 + $0x38] sm:$0xff]
        %v1493 = vld [vmem:[#allocation2 + $0x40] sm:$0xff]
        %v1494 = vld [vmem:[#allocation2 + $0x48] sm:$0xff]
        %v1495 = vld [vmem:[#allocation2 + $0x50] sm:$0xff]
        %v1496 = vld [vmem:[#allocation2 + $0x58] sm:$0xff]
        %v1497 = vld [vmem:[#allocation2 + $0x60] sm:$0xff]
        %v1498 = vld [vmem:[#allocation2 + $0x68] sm:$0xff]
        %v1499 = vld [vmem:[#allocation2 + $0x70] sm:$0xff]
        %v1500 = vld [vmem:[#allocation2 + $0x78] sm:$0xff]
        %v1501 = vld [vmem:[#allocation2 + $0x80] sm:$0xff]
        %v1502 = vld [vmem:[#allocation2 + $0x88] sm:$0xff]
        %v1503 = vld [vmem:[#allocation2 + $0x90] sm:$0xff]
        %v1504 = vld [vmem:[#allocation2 + $0x98] sm:$0xff]
        %v1505 = vadd.f32 %v1485, %v1465
        %v1506 = vadd.f32 %v1486, %v1466
        %v1507 = vadd.f32 %v1487, %v1467
        %v1508 = vadd.f32 %v1488, %v1468
        %v1509 = vadd.f32 %v1489, %v1469
        %v1510 = vadd.f32 %v1490, %v1470
        %v1511 = vadd.f32 %v1491, %v1471
        %v1512 = vadd.f32 %v1492, %v1472
        %v1513 = vadd.f32 %v1493, %v1473
        %v1514 = vadd.f32 %v1494, %v1474
        %v1515 = vadd.f32 %v1495, %v1475
        %v1516 = vadd.f32 %v1496, %v1476
        %v1517 = vadd.f32 %v1497, %v1477
        %v1518 = vadd.f32 %v1498, %v1478
        %v1519 = vadd.f32 %v1499, %v1479
        %v1520 = vadd.f32 %v1500, %v1480
        %v1521 = vadd.f32 %v1501, %v1481
        %v1522 = vadd.f32 %v1502, %v1482
        %v1523 = vadd.f32 %v1503, %v1483
        %v1524 = vadd.f32 %v1504, %v1484
        %1525 = vst.msk [vmem:[#allocation2] sm:$0xff] %vm579, %v1505
        %1526 = vst.msk [vmem:[#allocation2 + $0x8] sm:$0xff] %vm579, %v1506
        %1527 = vst.msk [vmem:[#allocation2 + $0x10] sm:$0xff] %vm579, %v1507
        %1528 = vst.msk [vmem:[#allocation2 + $0x18] sm:$0xff] %vm579, %v1508
        %1529 = vst.msk [vmem:[#allocation2 + $0x20] sm:$0xff] %vm579, %v1509
        %1530 = vst.msk [vmem:[#allocation2 + $0x28] sm:$0xff] %vm579, %v1510
        %1531 = vst.msk [vmem:[#allocation2 + $0x30] sm:$0xff] %vm579, %v1511
        %1532 = vst.msk [vmem:[#allocation2 + $0x38] sm:$0xff] %vm579, %v1512
        %1533 = vst.msk [vmem:[#allocation2 + $0x40] sm:$0xff] %vm579, %v1513
        %1534 = vst.msk [vmem:[#allocation2 + $0x48] sm:$0xff] %vm579, %v1514
        %1535 = vst.msk [vmem:[#allocation2 + $0x50] sm:$0xff] %vm579, %v1515
        %1536 = vst.msk [vmem:[#allocation2 + $0x58] sm:$0xff] %vm579, %v1516
        %1537 = vst.msk [vmem:[#allocation2 + $0x60] sm:$0xff] %vm579, %v1517
        %1538 = vst.msk [vmem:[#allocation2 + $0x68] sm:$0xff] %vm579, %v1518
        %1539 = vst.msk [vmem:[#allocation2 + $0x70] sm:$0xff] %vm579, %v1519
        %1540 = vst.msk [vmem:[#allocation2 + $0x78] sm:$0xff] %vm579, %v1520
        %1541 = vst.msk [vmem:[#allocation2 + $0x80] sm:$0xff] %vm579, %v1521
        %1542 = vst.msk [vmem:[#allocation2 + $0x88] sm:$0xff] %vm579, %v1522
        %1543 = vst.msk [vmem:[#allocation2 + $0x90] sm:$0xff] %vm579, %v1523
        %1544 = vst.msk [vmem:[#allocation2 + $0x98] sm:$0xff] %vm579, %v1524
        %p1545 = scmp.eq.s32.totalorder %s17, 1
        // Predicated region
        $region45: #{tpu_custom_call.1} parent=39 // pred_check
          %p1546 = pneg %p1545
        $region46: #{tpu_custom_call.1} parent=39 // pred_check_branch
          %1548 = sbr.rel (%p1546) target = $region48
        $region47: #{tpu_custom_call.1} parent=39 // pred_region
          %v1549 = vld [vmem:[#allocation2] sm:$0xff]
          %v1550 = vld [vmem:[#allocation2 + $0x8] sm:$0xff]
          %v1551 = vld [vmem:[#allocation2 + $0x10] sm:$0xff]
          %v1552 = vld [vmem:[#allocation2 + $0x18] sm:$0xff]
          %v1553 = vld [vmem:[#allocation2 + $0x20] sm:$0xff]
          %v1554 = vld [vmem:[#allocation2 + $0x28] sm:$0xff]
          %v1555 = vld [vmem:[#allocation2 + $0x30] sm:$0xff]
          %v1556 = vld [vmem:[#allocation2 + $0x38] sm:$0xff]
          %v1557 = vld [vmem:[#allocation2 + $0x40] sm:$0xff]
          %v1558 = vld [vmem:[#allocation2 + $0x48] sm:$0xff]
          %v1559 = vld [vmem:[#allocation2 + $0x50] sm:$0xff]
          %v1560 = vld [vmem:[#allocation2 + $0x58] sm:$0xff]
          %v1561 = vld [vmem:[#allocation2 + $0x60] sm:$0xff]
          %v1562 = vld [vmem:[#allocation2 + $0x68] sm:$0xff]
          %v1563 = vld [vmem:[#allocation2 + $0x70] sm:$0xff]
          %v1564 = vld [vmem:[#allocation2 + $0x78] sm:$0xff]
          %v1565 = vld [vmem:[#allocation2 + $0x80] sm:$0xff]
          %v1566 = vld [vmem:[#allocation2 + $0x88] sm:$0xff]
          %v1567 = vld [vmem:[#allocation2 + $0x90] sm:$0xff]
          %v1568 = vld [vmem:[#allocation2 + $0x98] sm:$0xff]
          %vm1569 = vcmask 7168
          %v1570 = vsel %vm1569, %v1549, 0.0
          %v1571 = vsel %vm1569, %v1550, 0.0
          %v1572 = vadd.f32 %v1570, %v1571
          %v1573 = vsel %vm1569, %v1551, 0.0
          %v1574 = vadd.f32 %v1572, %v1573
          %v1575 = vsel %vm1569, %v1552, 0.0
          %v1576 = vadd.f32 %v1574, %v1575
          %v1577 = vsel %vm1569, %v1553, 0.0
          %v1578 = vadd.f32 %v1576, %v1577
          %v1579 = vsel %vm1569, %v1554, 0.0
          %v1580 = vadd.f32 %v1578, %v1579
          %v1581 = vsel %vm1569, %v1555, 0.0
          %v1582 = vadd.f32 %v1580, %v1581
          %v1583 = vsel %vm1569, %v1556, 0.0
          %v1584 = vadd.f32 %v1582, %v1583
          %v1585 = vsel %vm1569, %v1557, 0.0
          %v1586 = vadd.f32 %v1584, %v1585
          %v1587 = vsel %vm1569, %v1558, 0.0
          %v1588 = vadd.f32 %v1586, %v1587
          %v1589 = vsel %vm1569, %v1559, 0.0
          %v1590 = vadd.f32 %v1588, %v1589
          %v1591 = vsel %vm1569, %v1560, 0.0
          %v1592 = vadd.f32 %v1590, %v1591
          %v1593 = vsel %vm1569, %v1561, 0.0
          %v1594 = vadd.f32 %v1592, %v1593
          %v1595 = vsel %vm1569, %v1562, 0.0
          %v1596 = vadd.f32 %v1594, %v1595
          %v1597 = vsel %vm1569, %v1563, 0.0
          %v1598 = vadd.f32 %v1596, %v1597
          %v1599 = vsel %vm1569, %v1564, 0.0
          %v1600 = vadd.f32 %v1598, %v1599
          %v1601 = vsel %vm1569, %v1565, 0.0
          %v1602 = vadd.f32 %v1600, %v1601
          %v1603 = vsel %vm1569, %v1566, 0.0
          %v1604 = vadd.f32 %v1602, %v1603
          %v1605 = vsel %vm1569, %v1567, 0.0
          %v1606 = vadd.f32 %v1604, %v1605
          %v1607 = vsel %vm1569, %v1568, 0.0
          %v1608 = vadd.f32 %v1606, %v1607
          %1609 = vadd.xlane.f32.xlu0 %v1608
          %v1610 = vpop.xlane.xlu0 %1609
          %v1611 = vrot.slane %v1610, 4
          %v1612 = vadd.f32 %v1610, %v1611
          %v1613 = vrot.slane %v1612, 2
          %v1614 = vadd.f32 %v1612, %v1613
          %v1615 = vrot.slane %v1614, 1
          %v1616 = vadd.f32 %v1614, %v1615
          %s1617 = vtos %v1616
          %s1618 = smul.f32 %s1617, 0.0020833334
          %1639 = vrot.lane.b32.xlu0 %v1549, 127
          %v1640 = vpop.permute.xlu0 %1639
          %1641 = vrot.lane.b32.xlu0 %v1550, 127
          %v1642 = vpop.permute.xlu0 %1641
          %1643 = vrot.lane.b32.xlu0 %v1551, 127
          %v1644 = vpop.permute.xlu0 %1643
          %1645 = vrot.lane.b32.xlu0 %v1552, 127
          %v1646 = vpop.permute.xlu0 %1645
          %1647 = vrot.lane.b32.xlu0 %v1553, 127
          %v1648 = vpop.permute.xlu0 %1647
          %1649 = vrot.lane.b32.xlu0 %v1554, 127
          %v1650 = vpop.permute.xlu0 %1649
          %1651 = vrot.lane.b32.xlu0 %v1555, 127
          %v1652 = vpop.permute.xlu0 %1651
          %1653 = vrot.lane.b32.xlu0 %v1556, 127
          %v1654 = vpop.permute.xlu0 %1653
          %1655 = vrot.lane.b32.xlu0 %v1557, 127
          %v1656 = vpop.permute.xlu0 %1655
          %1657 = vrot.lane.b32.xlu0 %v1558, 127
          %v1658 = vpop.permute.xlu0 %1657
          %1659 = vrot.lane.b32.xlu0 %v1559, 127
          %v1660 = vpop.permute.xlu0 %1659
          %1661 = vrot.lane.b32.xlu0 %v1560, 127
          %v1662 = vpop.permute.xlu0 %1661
          %1663 = vrot.lane.b32.xlu0 %v1561, 127
          %v1664 = vpop.permute.xlu0 %1663
          %1665 = vrot.lane.b32.xlu0 %v1562, 127
          %v1666 = vpop.permute.xlu0 %1665
          %1667 = vrot.lane.b32.xlu0 %v1563, 127
          %v1668 = vpop.permute.xlu0 %1667
          %1669 = vrot.lane.b32.xlu0 %v1564, 127
          %v1670 = vpop.permute.xlu0 %1669
          %1671 = vrot.lane.b32.xlu0 %v1565, 127
          %v1672 = vpop.permute.xlu0 %1671
          %1673 = vrot.lane.b32.xlu0 %v1566, 127
          %v1674 = vpop.permute.xlu0 %1673
          %1675 = vrot.lane.b32.xlu0 %v1567, 127
          %v1676 = vpop.permute.xlu0 %1675
          %1677 = vrot.lane.b32.xlu0 %v1568, 127
          %v1678 = vpop.permute.xlu0 %1677
          %v1699 = vsel %vm1569, %v1640, 0.0
          %v1700 = vsel %vm1569, %v1642, 0.0
          %v1701 = vadd.f32 %v1699, %v1700
          %v1702 = vsel %vm1569, %v1644, 0.0
          %v1703 = vadd.f32 %v1701, %v1702
          %v1704 = vsel %vm1569, %v1646, 0.0
          %v1705 = vadd.f32 %v1703, %v1704
          %v1706 = vsel %vm1569, %v1648, 0.0
          %v1707 = vadd.f32 %v1705, %v1706
          %v1708 = vsel %vm1569, %v1650, 0.0
          %v1709 = vadd.f32 %v1707, %v1708
          %v1710 = vsel %vm1569, %v1652, 0.0
          %v1711 = vadd.f32 %v1709, %v1710
          %v1712 = vsel %vm1569, %v1654, 0.0
          %v1713 = vadd.f32 %v1711, %v1712
          %v1714 = vsel %vm1569, %v1656, 0.0
          %v1715 = vadd.f32 %v1713, %v1714
          %v1716 = vsel %vm1569, %v1658, 0.0
          %v1717 = vadd.f32 %v1715, %v1716
          %v1718 = vsel %vm1569, %v1660, 0.0
          %v1719 = vadd.f32 %v1717, %v1718
          %v1720 = vsel %vm1569, %v1662, 0.0
          %v1721 = vadd.f32 %v1719, %v1720
          %v1722 = vsel %vm1569, %v1664, 0.0
          %v1723 = vadd.f32 %v1721, %v1722
          %v1724 = vsel %vm1569, %v1666, 0.0
          %v1725 = vadd.f32 %v1723, %v1724
          %v1726 = vsel %vm1569, %v1668, 0.0
          %v1727 = vadd.f32 %v1725, %v1726
          %v1728 = vsel %vm1569, %v1670, 0.0
          %v1729 = vadd.f32 %v1727, %v1728
          %v1730 = vsel %vm1569, %v1672, 0.0
          %v1731 = vadd.f32 %v1729, %v1730
          %v1732 = vsel %vm1569, %v1674, 0.0
          %v1733 = vadd.f32 %v1731, %v1732
          %v1734 = vsel %vm1569, %v1676, 0.0
          %v1735 = vadd.f32 %v1733, %v1734
          %v1736 = vsel %vm1569, %v1678, 0.0
          %v1737 = vadd.f32 %v1735, %v1736
          %1738 = vadd.xlane.f32.xlu0 %v1737
          %v1739 = vpop.xlane.xlu0 %1738
          %v1740 = vrot.slane %v1739, 4
          %v1741 = vadd.f32 %v1739, %v1740
          %v1742 = vrot.slane %v1741, 2
          %v1743 = vadd.f32 %v1741, %v1742
          %v1744 = vrot.slane %v1743, 1
          %v1745 = vadd.f32 %v1743, %v1744
          %s1746 = vtos %v1745
          %s1747 = smul.f32 %s1746, 0.005
          %1748 = vrot.lane.b32.xlu0 %v1549, 126
          %v1749 = vpop.permute.xlu0 %1748
          %1750 = vrot.lane.b32.xlu0 %v1550, 126
          %v1751 = vpop.permute.xlu0 %1750
          %1752 = vrot.lane.b32.xlu0 %v1551, 126
          %v1753 = vpop.permute.xlu0 %1752
          %1754 = vrot.lane.b32.xlu0 %v1552, 126
          %v1755 = vpop.permute.xlu0 %1754
          %1756 = vrot.lane.b32.xlu0 %v1553, 126
          %v1757 = vpop.permute.xlu0 %1756
          %1758 = vrot.lane.b32.xlu0 %v1554, 126
          %v1759 = vpop.permute.xlu0 %1758
          %1760 = vrot.lane.b32.xlu0 %v1555, 126
          %v1761 = vpop.permute.xlu0 %1760
          %1762 = vrot.lane.b32.xlu0 %v1556, 126
          %v1763 = vpop.permute.xlu0 %1762
          %1764 = vrot.lane.b32.xlu0 %v1557, 126
          %v1765 = vpop.permute.xlu0 %1764
          %1766 = vrot.lane.b32.xlu0 %v1558, 126
          %v1767 = vpop.permute.xlu0 %1766
          %1768 = vrot.lane.b32.xlu0 %v1559, 126
          %v1769 = vpop.permute.xlu0 %1768
          %1770 = vrot.lane.b32.xlu0 %v1560, 126
          %v1771 = vpop.permute.xlu0 %1770
          %1772 = vrot.lane.b32.xlu0 %v1561, 126
          %v1773 = vpop.permute.xlu0 %1772
          %1774 = vrot.lane.b32.xlu0 %v1562, 126
          %v1775 = vpop.permute.xlu0 %1774
          %1776 = vrot.lane.b32.xlu0 %v1563, 126
          %v1777 = vpop.permute.xlu0 %1776
          %1778 = vrot.lane.b32.xlu0 %v1564, 126
          %v1779 = vpop.permute.xlu0 %1778
          %1780 = vrot.lane.b32.xlu0 %v1565, 126
          %v1781 = vpop.permute.xlu0 %1780
          %1782 = vrot.lane.b32.xlu0 %v1566, 126
          %v1783 = vpop.permute.xlu0 %1782
          %1784 = vrot.lane.b32.xlu0 %v1567, 126
          %v1785 = vpop.permute.xlu0 %1784
          %1786 = vrot.lane.b32.xlu0 %v1568, 126
          %v1787 = vpop.permute.xlu0 %1786
          %v1808 = vsel %vm1569, %v1749, 0.0
          %v1809 = vsel %vm1569, %v1751, 0.0
          %v1810 = vadd.f32 %v1808, %v1809
          %v1811 = vsel %vm1569, %v1753, 0.0
          %v1812 = vadd.f32 %v1810, %v1811
          %v1813 = vsel %vm1569, %v1755, 0.0
          %v1814 = vadd.f32 %v1812, %v1813
          %v1815 = vsel %vm1569, %v1757, 0.0
          %v1816 = vadd.f32 %v1814, %v1815
          %v1817 = vsel %vm1569, %v1759, 0.0
          %v1818 = vadd.f32 %v1816, %v1817
          %v1819 = vsel %vm1569, %v1761, 0.0
          %v1820 = vadd.f32 %v1818, %v1819
          %v1821 = vsel %vm1569, %v1763, 0.0
          %v1822 = vadd.f32 %v1820, %v1821
          %v1823 = vsel %vm1569, %v1765, 0.0
          %v1824 = vadd.f32 %v1822, %v1823
          %v1825 = vsel %vm1569, %v1767, 0.0
          %v1826 = vadd.f32 %v1824, %v1825
          %v1827 = vsel %vm1569, %v1769, 0.0
          %v1828 = vadd.f32 %v1826, %v1827
          %v1829 = vsel %vm1569, %v1771, 0.0
          %v1830 = vadd.f32 %v1828, %v1829
          %v1831 = vsel %vm1569, %v1773, 0.0
          %v1832 = vadd.f32 %v1830, %v1831
          %v1833 = vsel %vm1569, %v1775, 0.0
          %v1834 = vadd.f32 %v1832, %v1833
          %v1835 = vsel %vm1569, %v1777, 0.0
          %v1836 = vadd.f32 %v1834, %v1835
          %v1837 = vsel %vm1569, %v1779, 0.0
          %v1838 = vadd.f32 %v1836, %v1837
          %v1839 = vsel %vm1569, %v1781, 0.0
          %v1840 = vadd.f32 %v1838, %v1839
          %v1841 = vsel %vm1569, %v1783, 0.0
          %v1842 = vadd.f32 %v1840, %v1841
          %v1843 = vsel %vm1569, %v1785, 0.0
          %v1844 = vadd.f32 %v1842, %v1843
          %v1845 = vsel %vm1569, %v1787, 0.0
          %v1846 = vadd.f32 %v1844, %v1845
          %1847 = vadd.xlane.f32.xlu0 %v1846
          %v1848 = vpop.xlane.xlu0 %1847
          %v1849 = vrot.slane %v1848, 4
          %v1850 = vadd.f32 %v1848, %v1849
          %v1851 = vrot.slane %v1850, 2
          %v1852 = vadd.f32 %v1850, %v1851
          %v1853 = vrot.slane %v1852, 1
          %v1854 = vadd.f32 %v1852, %v1853
          %s1855 = vtos %v1854
          %s1856 = smul.f32 %s1855, 0.00625
          %s1857 = smul.f32 %s1747, 0.1
          %s1858 = smul.f32 %s1856, 0.05
          %s1859 = sadd.f32 %s1857, %s1858
          %s1860 = sadd.f32 %s1859, %s1618
          %vm1861 = vcmp.eq.s32.totalorder %v1342, 2
          %vm1862 = vcmp.eq.s32.totalorder %v1342, 3
          %v1863 = vstv %s1860
          %v1864 = vsel %vm1862, %v1863, 0.0
          %v1865 = vstv %s1856
          %v1866 = vsel %vm1861, %v1865, %v1864
          %v1867 = vstv %s1747
          %v1868 = vsel %vm1344, %v1867, %v1866
          %v1869 = vstv %s1618
          %v1870 = vsel %vm1343, %v1869, %v1868
          %1871 = vst [vmem:[#allocation3] sm:$0x1] %v1870
        $region48: #{tpu_custom_call.1} parent=39 // pred_fallthru
          _
        // Predicated region
        $region49: #{tpu_custom_call.1} parent=39 // pred_check
          %p1872 = pneg %p180
        $region50: #{tpu_custom_call.1} parent=39 // pred_check_branch
          %1874 = sbr.rel (%p1872) target = $region52
        $region51: #{tpu_custom_call.1} parent=39 // pred_region
          %s1876 = ssub.s32 16, 16
          %1877 = vsyncadd [#allocation4], %s1876
          %s1879 = sshll.u32 [#allocation3], 4
          %s1880 = int_to_ptr.vmem [resolvable:$true] %s1879
          %1882 = dma.vmem_to_hbm [thread:$0]  %s1880, 16, %s5, [#allocation4]
        $region52: #{tpu_custom_call.1} parent=39 // pred_fallthru
          _
        // Predicated region
        $region53: #{tpu_custom_call.1} parent=39 // pred_check
          %p1883 = pneg %p180
        $region54: #{tpu_custom_call.1} parent=39 // pred_check_branch
          %1885 = sbr.rel (%p1883) target = $region56
        $region55: #{tpu_custom_call.1} parent=39 // pred_region
          %1886 = dma.done [#allocation4], 16
        $region56: #{tpu_custom_call.1} parent=39 // pred_fallthru
          _
      $region40: #{tpu_custom_call.1} parent=5 // pred_fallthru
        _
      %p1887 = scmp.le.s32.totalorder 2, %s12
      // Predicated region
      $region57: #{tpu_custom_call.1} parent=5 // pred_check
        %p1888 = pneg %p1887
      $region58: #{tpu_custom_call.1} parent=5 // pred_check_branch
        %1890 = sbr.rel (%p1888) target = $region60
      $region59: #{tpu_custom_call.1} parent=5 // pred_region
        %s1891 = ssub.s32 %s12, 2
      $region60: #{tpu_custom_call.1} parent=5 // pred_fallthru
        _
    $region6: #{tpu_custom_call.1} parent=1 // loop_footer
      %s16 = sadd.s32 1, %s12
    $region7: #{tpu_custom_call.1} parent=1 // loop_footer_branch
      %11 = sbr.rel target = $region3
    $region8: #{tpu_custom_call.1} parent=1 // loop_exit
      _
    %1892 = vsyncpa [#allocation4], 1
    %s1893 = scalar_lea.sflag [#allocation4], 1
    %1894 = vsyncpa %s1893, 1

</llo_original>
